<compile_context>
chip_gen: v7x
topology: tpu7x:2x2x1
jax: 0.10.0
libtpu: 0.0.40
codegen_flags: <defaults>
</compile_context>

<pallas_src>
import math

import jax
import jax.numpy as jnp
from jax import lax
from jax.experimental import pallas as pl

# ----------------------- small Gemma-like config ---------------------------
VOCAB = 64
VOCAB_PAD = 128          # lane-dense logits store; sliced back to VOCAB outside
HIDDEN = 32
N_HEADS = 2
HEAD_DIM = 16
INTERMEDIATE = 64
N_LAYERS = 2
RMS_EPS = 1e-6
ROPE_BASE = 10000.0


# --------------------------- fused Pallas kernel ----------------------------
def _gemma_fused_kernel(ids_ref, emb_ref, lmh_ref, rope_ref, bias_ref,
                        norms_ref, w_in_ref, w_out_ref, o_ref):
    D = HIDDEN
    Dh = HEAD_DIM
    half = Dh // 2
    HD = N_HEADS * HEAD_DIM
    I = INTERMEDIATE
    BS = ids_ref.shape[0]
    f32 = jnp.float32

    def rmsnorm(x, w):
        # Gemma RMSNorm: x * rsqrt(mean(x^2) + eps) * (1 + w), stats in f32
        var = jnp.mean(x * x, axis=-1, keepdims=True)
        return x * lax.rsqrt(var + RMS_EPS) * (1.0 + w)

    cos_t = rope_ref[0]          # [BS, Dh]
    ssin_t = rope_ref[1]         # [BS, Dh]  sign-folded: [-sin | +sin]
    bias = bias_ref[...]         # [BS, BS]  0 = keep, -1e30 = masked

    def rope(x):                 # x: [BS, Dh]; rotate-half via lane concat (XLU)
        xr = jnp.concatenate([x[:, half:], x[:, :half]], axis=-1)
        return x * cos_t + xr * ssin_t

    # ---- embedding via one-hot matmul (keeps everything inside the kernel) --
    ids = ids_ref[...]           # [BS, 1] int32
    onehot = (lax.broadcasted_iota(jnp.int32, (BS, VOCAB), 1) == ids).astype(f32)
    h = jnp.dot(onehot, emb_ref[...], preferred_element_type=f32)
    h = h * jnp.float32(math.sqrt(D))          # Gemma embedding scaling

    scale = 1.0 / math.sqrt(Dh)
    gelu_c = math.sqrt(2.0 / math.pi)
    contract_last = (((1,), (1,)), ((), ()))   # A[.., k] x B[.., k] -> A @ B.T

    for l in range(N_LAYERS):
        w_in = w_in_ref[l]                     # [D, 2*I + 3*HD]
        w_out = w_out_ref[l]                   # [HD + I, D]

        # ----------------------- attention block ----------------------------
        xn = rmsnorm(h, norms_ref[2 * l])
        qkv = jnp.dot(xn, w_in[:, 2 * I:], preferred_element_type=f32)  # [BS,3*HD]

        heads = []
        for hh in range(N_HEADS):
            q = rope(qkv[:, hh * Dh:(hh + 1) * Dh])                     # [BS, Dh]
            k = rope(qkv[:, HD + hh * Dh:HD + (hh + 1) * Dh])
            v = qkv[:, 2 * HD + hh * Dh:2 * HD + (hh + 1) * Dh]
            # one [BS,BS] score matmul covering all batches; cross-batch,
            # non-causal and padded-key entries are killed by the additive bias
            s = lax.dot_general(q, k, contract_last,
                                preferred_element_type=f32) * scale + bias
            s = s - jnp.max(s, axis=-1, keepdims=True)
            p = jnp.exp(s)
            inv = pl.reciprocal(jnp.sum(p, axis=-1, keepdims=True), approx=True)
            heads.append(jnp.dot(p, v, preferred_element_type=f32) * inv)
        attn = jnp.concatenate(heads, axis=-1)                          # [BS, HD]
        h = h + jnp.dot(attn, w_out[:HD, :], preferred_element_type=f32)

        # ----------------------- MLP block (GeGLU) ---------------------------
        xn = rmsnorm(h, norms_ref[2 * l + 1])
        gu = jnp.dot(xn, w_in[:, :2 * I], preferred_element_type=f32)   # [BS,2*I]
        g = gu[:, :I]
        u = gu[:, I:]
        gelu = 0.5 * g * (1.0 + jnp.tanh(gelu_c * (g + 0.044715 * g * g * g)))
        h = h + jnp.dot(gelu * u, w_out[HD:, :], preferred_element_type=f32)

    # ----------------------- final norm + tied LM head -----------------------
    xn = rmsnorm(h, norms_ref[2 * N_LAYERS])
    o_ref[...] = jnp.dot(xn, lmh_ref[...],
                         preferred_element_type=f32)        # [BS, VOCAB_PAD]


# ------------------------------- parameters ---------------------------------
def init_params(key):
    keys = jax.random.split(key, 1 + N_LAYERS)

    def nrm(k, shape, scale=0.02):
        return (scale * jax.random.normal(k, shape)).astype(jnp.float32)

    embed = nrm(keys[0], (VOCAB, HIDDEN))
    w_in, w_out = [], []
    for i in range(N_LAYERS):
        lk = jax.random.split(keys[1 + i], 7)
        wq = nrm(lk[0], (HIDDEN, N_HEADS * HEAD_DIM))
        wk = nrm(lk[1], (HIDDEN, N_HEADS * HEAD_DIM))
        wv = nrm(lk[2], (HIDDEN, N_HEADS * HEAD_DIM))
        wo = nrm(lk[3], (N_HEADS * HEAD_DIM, HIDDEN))
        wg = nrm(lk[4], (HIDDEN, INTERMEDIATE))
        wu = nrm(lk[5], (HIDDEN, INTERMEDIATE))
        wdn = nrm(lk[6], (INTERMEDIATE, HIDDEN))
        # packed input-projection weight: [gate|up | q|k|v] along the lane axis
        w_in.append(jnp.concatenate([wg, wu, wq, wk, wv], axis=1))   # [D, 2I+3HD]
        # packed output-projection weight: [wo ; wdown] along the sublane axis
        w_out.append(jnp.concatenate([wo, wdn], axis=0))             # [HD+I, D]

    # tied LM head, pre-transposed once and zero-padded to 128 lanes
    lm_head = jnp.zeros((HIDDEN, VOCAB_PAD), jnp.float32).at[:, :VOCAB].set(embed.T)

    return {
        "embed": embed,                                               # [V, D]
        "lm_head": lm_head,                                           # [D, 128]
        # norms packed: [n1_0, n2_0, n1_1, n2_1, final]  (Gemma zero-init gamma)
        "norms": jnp.zeros((2 * N_LAYERS + 1, 1, HIDDEN), jnp.float32),
        "w_in": jnp.stack(w_in),                                      # [L, D, 224]
        "w_out": jnp.stack(w_out),                                    # [L, 96, D]
    }


# ------------------------------- forward ------------------------------------
@jax.jit
def _gemma_forward_jit(params, input_ids, attention_mask):
    B, S = input_ids.shape
    Dh = HEAD_DIM
    half = Dh // 2
    BS = B * S

    # RoPE tables (depend only on S, Dh; constant-folded under jit).
    inv_freq = 1.0 / (ROPE_BASE ** (jnp.arange(half, dtype=jnp.float32) * 2.0 / Dh))
    ang = jnp.arange(S, dtype=jnp.float32)[:, None] * inv_freq[None, :]   # [S, half]
    cos = jnp.concatenate([jnp.cos(ang), jnp.cos(ang)], axis=-1)          # [S, Dh]
    ssin = jnp.concatenate([-jnp.sin(ang), jnp.sin(ang)], axis=-1)        # sign-folded
    rope_tab = jnp.stack([jnp.tile(cos, (B, 1)),
                          jnp.tile(ssin, (B, 1))])                        # [2, BS, Dh]

    # Additive attention bias: 0 where (same batch & causal & key not padded),
    # -1e30 elsewhere. Lets the kernel score all batches with one matmul.
    # NOTE: RoPE positions are 0..S-1 (right-padding assumption, as original).
    pos = jnp.arange(S)
    causal = pos[:, None] >= pos[None, :]                                 # [S, S]
    key_keep = attention_mask.astype(bool)                                # [B, S]
    bidx = jnp.arange(B)
    same_b = bidx[:, None, None, None] == bidx[None, None, :, None]       # [B,1,B,1]
    keep = same_b & causal[None, :, None, :] & key_keep[None, None, :, :] # [B,S,B,S]
    attn_bias = jnp.where(keep, 0.0, -1e30).astype(jnp.float32).reshape(BS, BS)

    ids2 = input_ids.reshape(BS, 1).astype(jnp.int32)

    logits_pad = pl.pallas_call(
        _gemma_fused_kernel,
        out_shape=jax.ShapeDtypeStruct((BS, VOCAB_PAD), jnp.float32),
    )(ids2, params["embed"], params["lm_head"], rope_tab, attn_bias,
      params["norms"], params["w_in"], params["w_out"])

    return logits_pad[:, :VOCAB].reshape(B, S, VOCAB)


def gemma_wrapper_forward(params, x, return_gating_data=False):
    """Equivalent of GemmaWrapper.forward: unpack dict, run model, return logits."""
    input_ids = x["input_ids"]
    attention_mask = x["attention_mask"]
    # TODO(synk): return_gating_data (MoE gating telemetry) has no equivalent
    # for this dense synthetic Gemma; the default logits path is implemented.
    return _gemma_forward_jit(params, input_ids, attention_mask)


if __name__ == "__main__":
    key = jax.random.PRNGKey(0)
    pkey, ikey = jax.random.split(key)
    params = init_params(pkey)

    B, S = 2, 8
    input_ids = jax.random.randint(ikey, (B, S), 0, VOCAB, dtype=jnp.int32)
    attention_mask = jnp.array(
        [[1, 1, 1, 1, 1, 1, 1, 1],
         [1, 1, 1, 1, 1, 1, 0, 0]], dtype=jnp.int32)
    x = {"input_ids": input_ids, "attention_mask": attention_mask}

    logits = gemma_wrapper_forward(params, x)
    jax.block_until_ready(logits)
    assert logits.shape == (B, S, VOCAB) and logits.dtype == jnp.float32
    assert bool(jnp.all(jnp.isfinite(logits)))
    print("KERNEL_OK")
</pallas_src>

<mosaic_0001>
module attributes {stable_mosaic.version = 11 : i64} {
  func.func @_gemma_fused_kernel(%arg0: memref<16x1xi32, #tpu.memory_space<vmem>>, %arg1: memref<64x32xf32, #tpu.memory_space<vmem>>, %arg2: memref<32x128xf32, #tpu.memory_space<vmem>>, %arg3: memref<2x16x16xf32, #tpu.memory_space<vmem>>, %arg4: memref<16x16xf32, #tpu.memory_space<vmem>>, %arg5: memref<5x1x32xf32, #tpu.memory_space<vmem>>, %arg6: memref<2x32x224xf32, #tpu.memory_space<vmem>>, %arg7: memref<2x96x32xf32, #tpu.memory_space<vmem>>, %arg8: memref<16x128xf32, #tpu.memory_space<vmem>>) attributes {dimension_semantics = [], scalar_prefetch = 0 : i64, scratch_operands = 0 : i64, tpu.core_type = #tpu.core_type<tc>} {
    %c0 = arith.constant 0 : index
    %c0_0 = arith.constant 0 : index
    %c0_1 = arith.constant 0 : index
    %0 = vector.load %arg3[%c0, %c0_0, %c0_1] : memref<2x16x16xf32, #tpu.memory_space<vmem>>, vector<1x16x16xf32>
    %1 = vector.shape_cast %0 : vector<1x16x16xf32> to vector<16x16xf32>
    %c1 = arith.constant 1 : index
    %c0_2 = arith.constant 0 : index
    %c0_3 = arith.constant 0 : index
    %2 = vector.load %arg3[%c1, %c0_2, %c0_3] : memref<2x16x16xf32, #tpu.memory_space<vmem>>, vector<1x16x16xf32>
    %3 = vector.shape_cast %2 : vector<1x16x16xf32> to vector<16x16xf32>
    %c0_4 = arith.constant 0 : index
    %c0_5 = arith.constant 0 : index
    %4 = vector.load %arg4[%c0_4, %c0_5] : memref<16x16xf32, #tpu.memory_space<vmem>>, vector<16x16xf32>
    %c0_6 = arith.constant 0 : index
    %c0_7 = arith.constant 0 : index
    %5 = vector.load %arg0[%c0_6, %c0_7] : memref<16x1xi32, #tpu.memory_space<vmem>>, vector<16x1xi32>
    %6 = tpu.iota {dimensions = array<i32: 1>} : vector<16x64xi32>
    %7 = vector.broadcast %5 : vector<16x1xi32> to vector<16x64xi32>
    %8 = arith.cmpi eq, %6, %7 : vector<16x64xi32>
    %9 = arith.extui %8 : vector<16x64xi1> to vector<16x64xi32>
    %10 = arith.sitofp %9 : vector<16x64xi32> to vector<16x64xf32>
    %c0_8 = arith.constant 0 : index
    %c0_9 = arith.constant 0 : index
    %11 = vector.load %arg1[%c0_8, %c0_9] : memref<64x32xf32, #tpu.memory_space<vmem>>, vector<64x32xf32>
    %cst = arith.constant dense<0.000000e+00> : vector<16x32xf32>
    %12 = tpu.matmul %10, %11, %cst {dimension_numbers = #tpu.dot_dimension_numbers<[1], [0], [0], [1], [0, 0, 1, 1], [], []>} : vector<16x64xf32>, vector<64x32xf32>, vector<16x32xf32> -> vector<16x32xf32>
    %cst_10 = arith.constant 5.65685415 : f32
    %13 = vector.broadcast %cst_10 : f32 to vector<16x32xf32>
    %14 = arith.mulf %12, %13 : vector<16x32xf32>
    %c0_11 = arith.constant 0 : index
    %c0_12 = arith.constant 0 : index
    %c0_13 = arith.constant 0 : index
    %15 = vector.load %arg6[%c0_11, %c0_12, %c0_13] : memref<2x32x224xf32, #tpu.memory_space<vmem>>, vector<1x32x224xf32>
    %16 = vector.shape_cast %15 : vector<1x32x224xf32> to vector<32x224xf32>
    %c0_14 = arith.constant 0 : index
    %c0_15 = arith.constant 0 : index
    %c0_16 = arith.constant 0 : index
    %17 = vector.load %arg7[%c0_14, %c0_15, %c0_16] : memref<2x96x32xf32, #tpu.memory_space<vmem>>, vector<1x96x32xf32>
    %18 = vector.shape_cast %17 : vector<1x96x32xf32> to vector<96x32xf32>
    %c0_17 = arith.constant 0 : index
    %c0_18 = arith.constant 0 : index
    %c0_19 = arith.constant 0 : index
    %19 = vector.load %arg5[%c0_17, %c0_18, %c0_19] : memref<5x1x32xf32, #tpu.memory_space<vmem>>, vector<1x1x32xf32>
    %20 = vector.shape_cast %19 : vector<1x1x32xf32> to vector<1x32xf32>
    %21 = arith.mulf %14, %14 : vector<16x32xf32>
    %cst_20 = arith.constant dense<0.000000e+00> : vector<16xf32>
    %22 = vector.multi_reduction <add>, %21, %cst_20 [1] : vector<16x32xf32> to vector<16xf32>
    %23 = vector.shape_cast %22 : vector<16xf32> to vector<16x1xf32>
    %cst_21 = arith.constant 3.200000e+01 : f32
    %24 = vector.broadcast %cst_21 : f32 to vector<16x1xf32>
    %25 = arith.divf %23, %24 : vector<16x1xf32>
    %cst_22 = arith.constant 9.99999997E-7 : f32
    %26 = vector.broadcast %cst_22 : f32 to vector<16x1xf32>
    %27 = arith.addf %25, %26 : vector<16x1xf32>
    %28 = math.rsqrt %27 : vector<16x1xf32>
    %29 = vector.broadcast %28 : vector<16x1xf32> to vector<16x32xf32>
    %30 = arith.mulf %14, %29 : vector<16x32xf32>
    %cst_23 = arith.constant 1.000000e+00 : f32
    %31 = vector.broadcast %cst_23 : f32 to vector<1x32xf32>
    %32 = arith.addf %31, %20 : vector<1x32xf32>
    %33 = vector.broadcast %32 : vector<1x32xf32> to vector<16x32xf32>
    %34 = arith.mulf %30, %33 : vector<16x32xf32>
    %35 = vector.extract_strided_slice %16 {offsets = [0, 128], sizes = [32, 96], strides = [1, 1]} : vector<32x224xf32> to vector<32x96xf32>
    %cst_24 = arith.constant dense<0.000000e+00> : vector<16x96xf32>
    %36 = tpu.matmul %34, %35, %cst_24 {dimension_numbers = #tpu.dot_dimension_numbers<[1], [0], [0], [1], [0, 0, 1, 1], [], []>} : vector<16x32xf32>, vector<32x96xf32>, vector<16x96xf32> -> vector<16x96xf32>
    %37 = vector.extract_strided_slice %36 {offsets = [0, 0], sizes = [16, 16], strides = [1, 1]} : vector<16x96xf32> to vector<16x16xf32>
    %38 = vector.extract_strided_slice %37 {offsets = [0, 8], sizes = [16, 8], strides = [1, 1]} : vector<16x16xf32> to vector<16x8xf32>
    %39 = vector.extract_strided_slice %37 {offsets = [0, 0], sizes = [16, 8], strides = [1, 1]} : vector<16x16xf32> to vector<16x8xf32>
    %40 = tpu.concatenate %38, %39 in 1 : vector<16x8xf32>, vector<16x8xf32> -> vector<16x16xf32>
    %41 = arith.mulf %37, %1 : vector<16x16xf32>
    %42 = arith.mulf %40, %3 : vector<16x16xf32>
    %43 = arith.addf %41, %42 : vector<16x16xf32>
    %44 = vector.extract_strided_slice %36 {offsets = [0, 32], sizes = [16, 16], strides = [1, 1]} : vector<16x96xf32> to vector<16x16xf32>
    %45 = vector.extract_strided_slice %44 {offsets = [0, 8], sizes = [16, 8], strides = [1, 1]} : vector<16x16xf32> to vector<16x8xf32>
    %46 = vector.extract_strided_slice %44 {offsets = [0, 0], sizes = [16, 8], strides = [1, 1]} : vector<16x16xf32> to vector<16x8xf32>
    %47 = tpu.concatenate %45, %46 in 1 : vector<16x8xf32>, vector<16x8xf32> -> vector<16x16xf32>
    %48 = arith.mulf %44, %1 : vector<16x16xf32>
    %49 = arith.mulf %47, %3 : vector<16x16xf32>
    %50 = arith.addf %48, %49 : vector<16x16xf32>
    %51 = vector.extract_strided_slice %36 {offsets = [0, 64], sizes = [16, 16], strides = [1, 1]} : vector<16x96xf32> to vector<16x16xf32>
    %cst_25 = arith.constant dense<0.000000e+00> : vector<16x16xf32>
    %52 = tpu.matmul %43, %50, %cst_25 {dimension_numbers = #tpu.dot_dimension_numbers<[1], [1], [0], [0], [0, 0, 1, 0], [], []>} : vector<16x16xf32>, vector<16x16xf32>, vector<16x16xf32> -> vector<16x16xf32>
    %cst_26 = arith.constant 2.500000e-01 : f32
    %53 = vector.broadcast %cst_26 : f32 to vector<16x16xf32>
    %54 = arith.mulf %52, %53 : vector<16x16xf32>
    %55 = arith.addf %54, %4 : vector<16x16xf32>
    %cst_27 = arith.constant dense<0xFF800000> : vector<16xf32>
    %56 = vector.multi_reduction <maximumf>, %55, %cst_27 [1] : vector<16x16xf32> to vector<16xf32>
    %57 = vector.shape_cast %56 : vector<16xf32> to vector<16x1xf32>
    %58 = vector.broadcast %57 : vector<16x1xf32> to vector<16x16xf32>
    %59 = arith.subf %55, %58 : vector<16x16xf32>
    %60 = math.exp %59 : vector<16x16xf32>
    %cst_28 = arith.constant dense<0.000000e+00> : vector<16xf32>
    %61 = vector.multi_reduction <add>, %60, %cst_28 [1] : vector<16x16xf32> to vector<16xf32>
    %62 = vector.shape_cast %61 : vector<16xf32> to vector<16x1xf32>
    %63 = tpu.reciprocal %62 {approx = true} : vector<16x1xf32> -> vector<16x1xf32>
    %cst_29 = arith.constant dense<0.000000e+00> : vector<16x16xf32>
    %64 = tpu.matmul %60, %51, %cst_29 {dimension_numbers = #tpu.dot_dimension_numbers<[1], [0], [0], [1], [0, 0, 1, 1], [], []>} : vector<16x16xf32>, vector<16x16xf32>, vector<16x16xf32> -> vector<16x16xf32>
    %65 = vector.broadcast %63 : vector<16x1xf32> to vector<16x16xf32>
    %66 = arith.mulf %64, %65 : vector<16x16xf32>
    %67 = vector.extract_strided_slice %36 {offsets = [0, 16], sizes = [16, 16], strides = [1, 1]} : vector<16x96xf32> to vector<16x16xf32>
    %68 = vector.extract_strided_slice %67 {offsets = [0, 8], sizes = [16, 8], strides = [1, 1]} : vector<16x16xf32> to vector<16x8xf32>
    %69 = vector.extract_strided_slice %67 {offsets = [0, 0], sizes = [16, 8], strides = [1, 1]} : vector<16x16xf32> to vector<16x8xf32>
    %70 = tpu.concatenate %68, %69 in 1 : vector<16x8xf32>, vector<16x8xf32> -> vector<16x16xf32>
    %71 = arith.mulf %67, %1 : vector<16x16xf32>
    %72 = arith.mulf %70, %3 : vector<16x16xf32>
    %73 = arith.addf %71, %72 : vector<16x16xf32>
    %74 = vector.extract_strided_slice %36 {offsets = [0, 48], sizes = [16, 16], strides = [1, 1]} : vector<16x96xf32> to vector<16x16xf32>
    %75 = vector.extract_strided_slice %74 {offsets = [0, 8], sizes = [16, 8], strides = [1, 1]} : vector<16x16xf32> to vector<16x8xf32>
    %76 = vector.extract_strided_slice %74 {offsets = [0, 0], sizes = [16, 8], strides = [1, 1]} : vector<16x16xf32> to vector<16x8xf32>
    %77 = tpu.concatenate %75, %76 in 1 : vector<16x8xf32>, vector<16x8xf32> -> vector<16x16xf32>
    %78 = arith.mulf %74, %1 : vector<16x16xf32>
    %79 = arith.mulf %77, %3 : vector<16x16xf32>
    %80 = arith.addf %78, %79 : vector<16x16xf32>
    %81 = vector.extract_strided_slice %36 {offsets = [0, 80], sizes = [16, 16], strides = [1, 1]} : vector<16x96xf32> to vector<16x16xf32>
    %cst_30 = arith.constant dense<0.000000e+00> : vector<16x16xf32>
    %82 = tpu.matmul %73, %80, %cst_30 {dimension_numbers = #tpu.dot_dimension_numbers<[1], [1], [0], [0], [0, 0, 1, 0], [], []>} : vector<16x16xf32>, vector<16x16xf32>, vector<16x16xf32> -> vector<16x16xf32>
    %cst_31 = arith.constant 2.500000e-01 : f32
    %83 = vector.broadcast %cst_31 : f32 to vector<16x16xf32>
    %84 = arith.mulf %82, %83 : vector<16x16xf32>
    %85 = arith.addf %84, %4 : vector<16x16xf32>
    %cst_32 = arith.constant dense<0xFF800000> : vector<16xf32>
    %86 = vector.multi_reduction <maximumf>, %85, %cst_32 [1] : vector<16x16xf32> to vector<16xf32>
    %87 = vector.shape_cast %86 : vector<16xf32> to vector<16x1xf32>
    %88 = vector.broadcast %87 : vector<16x1xf32> to vector<16x16xf32>
    %89 = arith.subf %85, %88 : vector<16x16xf32>
    %90 = math.exp %89 : vector<16x16xf32>
    %cst_33 = arith.constant dense<0.000000e+00> : vector<16xf32>
    %91 = vector.multi_reduction <add>, %90, %cst_33 [1] : vector<16x16xf32> to vector<16xf32>
    %92 = vector.shape_cast %91 : vector<16xf32> to vector<16x1xf32>
    %93 = tpu.reciprocal %92 {approx = true} : vector<16x1xf32> -> vector<16x1xf32>
    %cst_34 = arith.constant dense<0.000000e+00> : vector<16x16xf32>
    %94 = tpu.matmul %90, %81, %cst_34 {dimension_numbers = #tpu.dot_dimension_numbers<[1], [0], [0], [1], [0, 0, 1, 1], [], []>} : vector<16x16xf32>, vector<16x16xf32>, vector<16x16xf32> -> vector<16x16xf32>
    %95 = vector.broadcast %93 : vector<16x1xf32> to vector<16x16xf32>
    %96 = arith.mulf %94, %95 : vector<16x16xf32>
    %97 = tpu.concatenate %66, %96 in 1 : vector<16x16xf32>, vector<16x16xf32> -> vector<16x32xf32>
    %98 = vector.extract_strided_slice %18 {offsets = [0, 0], sizes = [32, 32], strides = [1, 1]} : vector<96x32xf32> to vector<32x32xf32>
    %cst_35 = arith.constant dense<0.000000e+00> : vector<16x32xf32>
    %99 = tpu.matmul %97, %98, %cst_35 {dimension_numbers = #tpu.dot_dimension_numbers<[1], [0], [0], [1], [0, 0, 1, 1], [], []>} : vector<16x32xf32>, vector<32x32xf32>, vector<16x32xf32> -> vector<16x32xf32>
    %100 = arith.addf %14, %99 : vector<16x32xf32>
    %c1_36 = arith.constant 1 : index
    %c0_37 = arith.constant 0 : index
    %c0_38 = arith.constant 0 : index
    %101 = vector.load %arg5[%c1_36, %c0_37, %c0_38] : memref<5x1x32xf32, #tpu.memory_space<vmem>>, vector<1x1x32xf32>
    %102 = vector.shape_cast %101 : vector<1x1x32xf32> to vector<1x32xf32>
    %103 = arith.mulf %100, %100 : vector<16x32xf32>
    %cst_39 = arith.constant dense<0.000000e+00> : vector<16xf32>
    %104 = vector.multi_reduction <add>, %103, %cst_39 [1] : vector<16x32xf32> to vector<16xf32>
    %105 = vector.shape_cast %104 : vector<16xf32> to vector<16x1xf32>
    %cst_40 = arith.constant 3.200000e+01 : f32
    %106 = vector.broadcast %cst_40 : f32 to vector<16x1xf32>
    %107 = arith.divf %105, %106 : vector<16x1xf32>
    %cst_41 = arith.constant 9.99999997E-7 : f32
    %108 = vector.broadcast %cst_41 : f32 to vector<16x1xf32>
    %109 = arith.addf %107, %108 : vector<16x1xf32>
    %110 = math.rsqrt %109 : vector<16x1xf32>
    %111 = vector.broadcast %110 : vector<16x1xf32> to vector<16x32xf32>
    %112 = arith.mulf %100, %111 : vector<16x32xf32>
    %cst_42 = arith.constant 1.000000e+00 : f32
    %113 = vector.broadcast %cst_42 : f32 to vector<1x32xf32>
    %114 = arith.addf %113, %102 : vector<1x32xf32>
    %115 = vector.broadcast %114 : vector<1x32xf32> to vector<16x32xf32>
    %116 = arith.mulf %112, %115 : vector<16x32xf32>
    %117 = vector.extract_strided_slice %16 {offsets = [0, 0], sizes = [32, 128], strides = [1, 1]} : vector<32x224xf32> to vector<32x128xf32>
    %cst_43 = arith.constant dense<0.000000e+00> : vector<16x128xf32>
    %118 = tpu.matmul %116, %117, %cst_43 {dimension_numbers = #tpu.dot_dimension_numbers<[1], [0], [0], [1], [0, 0, 1, 1], [], []>} : vector<16x32xf32>, vector<32x128xf32>, vector<16x128xf32> -> vector<16x128xf32>
    %119 = vector.extract_strided_slice %118 {offsets = [0, 0], sizes = [16, 64], strides = [1, 1]} : vector<16x128xf32> to vector<16x64xf32>
    %120 = vector.extract_strided_slice %118 {offsets = [0, 64], sizes = [16, 64], strides = [1, 1]} : vector<16x128xf32> to vector<16x64xf32>
    %cst_44 = arith.constant 5.000000e-01 : f32
    %121 = vector.broadcast %cst_44 : f32 to vector<16x64xf32>
    %122 = arith.mulf %121, %119 : vector<16x64xf32>
    %cst_45 = arith.constant 4.471500e-02 : f32
    %123 = vector.broadcast %cst_45 : f32 to vector<16x64xf32>
    %124 = arith.mulf %123, %119 : vector<16x64xf32>
    %125 = arith.mulf %124, %119 : vector<16x64xf32>
    %126 = arith.mulf %125, %119 : vector<16x64xf32>
    %127 = arith.addf %119, %126 : vector<16x64xf32>
    %cst_46 = arith.constant 0.797884583 : f32
    %128 = vector.broadcast %cst_46 : f32 to vector<16x64xf32>
    %129 = arith.mulf %128, %127 : vector<16x64xf32>
    %130 = math.tanh %129 : vector<16x64xf32>
    %cst_47 = arith.constant 1.000000e+00 : f32
    %131 = vector.broadcast %cst_47 : f32 to vector<16x64xf32>
    %132 = arith.addf %131, %130 : vector<16x64xf32>
    %133 = arith.mulf %122, %132 : vector<16x64xf32>
    %134 = arith.mulf %133, %120 : vector<16x64xf32>
    %135 = vector.extract_strided_slice %18 {offsets = [32, 0], sizes = [64, 32], strides = [1, 1]} : vector<96x32xf32> to vector<64x32xf32>
    %cst_48 = arith.constant dense<0.000000e+00> : vector<16x32xf32>
    %136 = tpu.matmul %134, %135, %cst_48 {dimension_numbers = #tpu.dot_dimension_numbers<[1], [0], [0], [1], [0, 0, 1, 1], [], []>} : vector<16x64xf32>, vector<64x32xf32>, vector<16x32xf32> -> vector<16x32xf32>
    %137 = arith.addf %100, %136 : vector<16x32xf32>
    %c1_49 = arith.constant 1 : index
    %c0_50 = arith.constant 0 : index
    %c0_51 = arith.constant 0 : index
    %138 = vector.load %arg6[%c1_49, %c0_50, %c0_51] : memref<2x32x224xf32, #tpu.memory_space<vmem>>, vector<1x32x224xf32>
    %139 = vector.shape_cast %138 : vector<1x32x224xf32> to vector<32x224xf32>
    %c1_52 = arith.constant 1 : index
    %c0_53 = arith.constant 0 : index
    %c0_54 = arith.constant 0 : index
    %140 = vector.load %arg7[%c1_52, %c0_53, %c0_54] : memref<2x96x32xf32, #tpu.memory_space<vmem>>, vector<1x96x32xf32>
    %141 = vector.shape_cast %140 : vector<1x96x32xf32> to vector<96x32xf32>
    %c2 = arith.constant 2 : index
    %c0_55 = arith.constant 0 : index
    %c0_56 = arith.constant 0 : index
    %142 = vector.load %arg5[%c2, %c0_55, %c0_56] : memref<5x1x32xf32, #tpu.memory_space<vmem>>, vector<1x1x32xf32>
    %143 = vector.shape_cast %142 : vector<1x1x32xf32> to vector<1x32xf32>
    %144 = arith.mulf %137, %137 : vector<16x32xf32>
    %cst_57 = arith.constant dense<0.000000e+00> : vector<16xf32>
    %145 = vector.multi_reduction <add>, %144, %cst_57 [1] : vector<16x32xf32> to vector<16xf32>
    %146 = vector.shape_cast %145 : vector<16xf32> to vector<16x1xf32>
    %cst_58 = arith.constant 3.200000e+01 : f32
    %147 = vector.broadcast %cst_58 : f32 to vector<16x1xf32>
    %148 = arith.divf %146, %147 : vector<16x1xf32>
    %cst_59 = arith.constant 9.99999997E-7 : f32
    %149 = vector.broadcast %cst_59 : f32 to vector<16x1xf32>
    %150 = arith.addf %148, %149 : vector<16x1xf32>
    %151 = math.rsqrt %150 : vector<16x1xf32>
    %152 = vector.broadcast %151 : vector<16x1xf32> to vector<16x32xf32>
    %153 = arith.mulf %137, %152 : vector<16x32xf32>
    %cst_60 = arith.constant 1.000000e+00 : f32
    %154 = vector.broadcast %cst_60 : f32 to vector<1x32xf32>
    %155 = arith.addf %154, %143 : vector<1x32xf32>
    %156 = vector.broadcast %155 : vector<1x32xf32> to vector<16x32xf32>
    %157 = arith.mulf %153, %156 : vector<16x32xf32>
    %158 = vector.extract_strided_slice %139 {offsets = [0, 128], sizes = [32, 96], strides = [1, 1]} : vector<32x224xf32> to vector<32x96xf32>
    %cst_61 = arith.constant dense<0.000000e+00> : vector<16x96xf32>
    %159 = tpu.matmul %157, %158, %cst_61 {dimension_numbers = #tpu.dot_dimension_numbers<[1], [0], [0], [1], [0, 0, 1, 1], [], []>} : vector<16x32xf32>, vector<32x96xf32>, vector<16x96xf32> -> vector<16x96xf32>
    %160 = vector.extract_strided_slice %159 {offsets = [0, 0], sizes = [16, 16], strides = [1, 1]} : vector<16x96xf32> to vector<16x16xf32>
    %161 = vector.extract_strided_slice %160 {offsets = [0, 8], sizes = [16, 8], strides = [1, 1]} : vector<16x16xf32> to vector<16x8xf32>
    %162 = vector.extract_strided_slice %160 {offsets = [0, 0], sizes = [16, 8], strides = [1, 1]} : vector<16x16xf32> to vector<16x8xf32>
    %163 = tpu.concatenate %161, %162 in 1 : vector<16x8xf32>, vector<16x8xf32> -> vector<16x16xf32>
    %164 = arith.mulf %160, %1 : vector<16x16xf32>
    %165 = arith.mulf %163, %3 : vector<16x16xf32>
    %166 = arith.addf %164, %165 : vector<16x16xf32>
    %167 = vector.extract_strided_slice %159 {offsets = [0, 32], sizes = [16, 16], strides = [1, 1]} : vector<16x96xf32> to vector<16x16xf32>
    %168 = vector.extract_strided_slice %167 {offsets = [0, 8], sizes = [16, 8], strides = [1, 1]} : vector<16x16xf32> to vector<16x8xf32>
    %169 = vector.extract_strided_slice %167 {offsets = [0, 0], sizes = [16, 8], strides = [1, 1]} : vector<16x16xf32> to vector<16x8xf32>
    %170 = tpu.concatenate %168, %169 in 1 : vector<16x8xf32>, vector<16x8xf32> -> vector<16x16xf32>
    %171 = arith.mulf %167, %1 : vector<16x16xf32>
    %172 = arith.mulf %170, %3 : vector<16x16xf32>
    %173 = arith.addf %171, %172 : vector<16x16xf32>
    %174 = vector.extract_strided_slice %159 {offsets = [0, 64], sizes = [16, 16], strides = [1, 1]} : vector<16x96xf32> to vector<16x16xf32>
    %cst_62 = arith.constant dense<0.000000e+00> : vector<16x16xf32>
    %175 = tpu.matmul %166, %173, %cst_62 {dimension_numbers = #tpu.dot_dimension_numbers<[1], [1], [0], [0], [0, 0, 1, 0], [], []>} : vector<16x16xf32>, vector<16x16xf32>, vector<16x16xf32> -> vector<16x16xf32>
    %cst_63 = arith.constant 2.500000e-01 : f32
    %176 = vector.broadcast %cst_63 : f32 to vector<16x16xf32>
    %177 = arith.mulf %175, %176 : vector<16x16xf32>
    %178 = arith.addf %177, %4 : vector<16x16xf32>
    %cst_64 = arith.constant dense<0xFF800000> : vector<16xf32>
    %179 = vector.multi_reduction <maximumf>, %178, %cst_64 [1] : vector<16x16xf32> to vector<16xf32>
    %180 = vector.shape_cast %179 : vector<16xf32> to vector<16x1xf32>
    %181 = vector.broadcast %180 : vector<16x1xf32> to vector<16x16xf32>
    %182 = arith.subf %178, %181 : vector<16x16xf32>
    %183 = math.exp %182 : vector<16x16xf32>
    %cst_65 = arith.constant dense<0.000000e+00> : vector<16xf32>
    %184 = vector.multi_reduction <add>, %183, %cst_65 [1] : vector<16x16xf32> to vector<16xf32>
    %185 = vector.shape_cast %184 : vector<16xf32> to vector<16x1xf32>
    %186 = tpu.reciprocal %185 {approx = true} : vector<16x1xf32> -> vector<16x1xf32>
    %cst_66 = arith.constant dense<0.000000e+00> : vector<16x16xf32>
    %187 = tpu.matmul %183, %174, %cst_66 {dimension_numbers = #tpu.dot_dimension_numbers<[1], [0], [0], [1], [0, 0, 1, 1], [], []>} : vector<16x16xf32>, vector<16x16xf32>, vector<16x16xf32> -> vector<16x16xf32>
    %188 = vector.broadcast %186 : vector<16x1xf32> to vector<16x16xf32>
    %189 = arith.mulf %187, %188 : vector<16x16xf32>
    %190 = vector.extract_strided_slice %159 {offsets = [0, 16], sizes = [16, 16], strides = [1, 1]} : vector<16x96xf32> to vector<16x16xf32>
    %191 = vector.extract_strided_slice %190 {offsets = [0, 8], sizes = [16, 8], strides = [1, 1]} : vector<16x16xf32> to vector<16x8xf32>
    %192 = vector.extract_strided_slice %190 {offsets = [0, 0], sizes = [16, 8], strides = [1, 1]} : vector<16x16xf32> to vector<16x8xf32>
    %193 = tpu.concatenate %191, %192 in 1 : vector<16x8xf32>, vector<16x8xf32> -> vector<16x16xf32>
    %194 = arith.mulf %190, %1 : vector<16x16xf32>
    %195 = arith.mulf %193, %3 : vector<16x16xf32>
    %196 = arith.addf %194, %195 : vector<16x16xf32>
    %197 = vector.extract_strided_slice %159 {offsets = [0, 48], sizes = [16, 16], strides = [1, 1]} : vector<16x96xf32> to vector<16x16xf32>
    %198 = vector.extract_strided_slice %197 {offsets = [0, 8], sizes = [16, 8], strides = [1, 1]} : vector<16x16xf32> to vector<16x8xf32>
    %199 = vector.extract_strided_slice %197 {offsets = [0, 0], sizes = [16, 8], strides = [1, 1]} : vector<16x16xf32> to vector<16x8xf32>
    %200 = tpu.concatenate %198, %199 in 1 : vector<16x8xf32>, vector<16x8xf32> -> vector<16x16xf32>
    %201 = arith.mulf %197, %1 : vector<16x16xf32>
    %202 = arith.mulf %200, %3 : vector<16x16xf32>
    %203 = arith.addf %201, %202 : vector<16x16xf32>
    %204 = vector.extract_strided_slice %159 {offsets = [0, 80], sizes = [16, 16], strides = [1, 1]} : vector<16x96xf32> to vector<16x16xf32>
    %cst_67 = arith.constant dense<0.000000e+00> : vector<16x16xf32>
    %205 = tpu.matmul %196, %203, %cst_67 {dimension_numbers = #tpu.dot_dimension_numbers<[1], [1], [0], [0], [0, 0, 1, 0], [], []>} : vector<16x16xf32>, vector<16x16xf32>, vector<16x16xf32> -> vector<16x16xf32>
    %cst_68 = arith.constant 2.500000e-01 : f32
    %206 = vector.broadcast %cst_68 : f32 to vector<16x16xf32>
    %207 = arith.mulf %205, %206 : vector<16x16xf32>
    %208 = arith.addf %207, %4 : vector<16x16xf32>
    %cst_69 = arith.constant dense<0xFF800000> : vector<16xf32>
    %209 = vector.multi_reduction <maximumf>, %208, %cst_69 [1] : vector<16x16xf32> to vector<16xf32>
    %210 = vector.shape_cast %209 : vector<16xf32> to vector<16x1xf32>
    %211 = vector.broadcast %210 : vector<16x1xf32> to vector<16x16xf32>
    %212 = arith.subf %208, %211 : vector<16x16xf32>
    %213 = math.exp %212 : vector<16x16xf32>
    %cst_70 = arith.constant dense<0.000000e+00> : vector<16xf32>
    %214 = vector.multi_reduction <add>, %213, %cst_70 [1] : vector<16x16xf32> to vector<16xf32>
    %215 = vector.shape_cast %214 : vector<16xf32> to vector<16x1xf32>
    %216 = tpu.reciprocal %215 {approx = true} : vector<16x1xf32> -> vector<16x1xf32>
    %cst_71 = arith.constant dense<0.000000e+00> : vector<16x16xf32>
    %217 = tpu.matmul %213, %204, %cst_71 {dimension_numbers = #tpu.dot_dimension_numbers<[1], [0], [0], [1], [0, 0, 1, 1], [], []>} : vector<16x16xf32>, vector<16x16xf32>, vector<16x16xf32> -> vector<16x16xf32>
    %218 = vector.broadcast %216 : vector<16x1xf32> to vector<16x16xf32>
    %219 = arith.mulf %217, %218 : vector<16x16xf32>
    %220 = tpu.concatenate %189, %219 in 1 : vector<16x16xf32>, vector<16x16xf32> -> vector<16x32xf32>
    %221 = vector.extract_strided_slice %141 {offsets = [0, 0], sizes = [32, 32], strides = [1, 1]} : vector<96x32xf32> to vector<32x32xf32>
    %cst_72 = arith.constant dense<0.000000e+00> : vector<16x32xf32>
    %222 = tpu.matmul %220, %221, %cst_72 {dimension_numbers = #tpu.dot_dimension_numbers<[1], [0], [0], [1], [0, 0, 1, 1], [], []>} : vector<16x32xf32>, vector<32x32xf32>, vector<16x32xf32> -> vector<16x32xf32>
    %223 = arith.addf %137, %222 : vector<16x32xf32>
    %c3 = arith.constant 3 : index
    %c0_73 = arith.constant 0 : index
    %c0_74 = arith.constant 0 : index
    %224 = vector.load %arg5[%c3, %c0_73, %c0_74] : memref<5x1x32xf32, #tpu.memory_space<vmem>>, vector<1x1x32xf32>
    %225 = vector.shape_cast %224 : vector<1x1x32xf32> to vector<1x32xf32>
    %226 = arith.mulf %223, %223 : vector<16x32xf32>
    %cst_75 = arith.constant dense<0.000000e+00> : vector<16xf32>
    %227 = vector.multi_reduction <add>, %226, %cst_75 [1] : vector<16x32xf32> to vector<16xf32>
    %228 = vector.shape_cast %227 : vector<16xf32> to vector<16x1xf32>
    %cst_76 = arith.constant 3.200000e+01 : f32
    %229 = vector.broadcast %cst_76 : f32 to vector<16x1xf32>
    %230 = arith.divf %228, %229 : vector<16x1xf32>
    %cst_77 = arith.constant 9.99999997E-7 : f32
    %231 = vector.broadcast %cst_77 : f32 to vector<16x1xf32>
    %232 = arith.addf %230, %231 : vector<16x1xf32>
    %233 = math.rsqrt %232 : vector<16x1xf32>
    %234 = vector.broadcast %233 : vector<16x1xf32> to vector<16x32xf32>
    %235 = arith.mulf %223, %234 : vector<16x32xf32>
    %cst_78 = arith.constant 1.000000e+00 : f32
    %236 = vector.broadcast %cst_78 : f32 to vector<1x32xf32>
    %237 = arith.addf %236, %225 : vector<1x32xf32>
    %238 = vector.broadcast %237 : vector<1x32xf32> to vector<16x32xf32>
    %239 = arith.mulf %235, %238 : vector<16x32xf32>
    %240 = vector.extract_strided_slice %139 {offsets = [0, 0], sizes = [32, 128], strides = [1, 1]} : vector<32x224xf32> to vector<32x128xf32>
    %cst_79 = arith.constant dense<0.000000e+00> : vector<16x128xf32>
    %241 = tpu.matmul %239, %240, %cst_79 {dimension_numbers = #tpu.dot_dimension_numbers<[1], [0], [0], [1], [0, 0, 1, 1], [], []>} : vector<16x32xf32>, vector<32x128xf32>, vector<16x128xf32> -> vector<16x128xf32>
    %242 = vector.extract_strided_slice %241 {offsets = [0, 0], sizes = [16, 64], strides = [1, 1]} : vector<16x128xf32> to vector<16x64xf32>
    %243 = vector.extract_strided_slice %241 {offsets = [0, 64], sizes = [16, 64], strides = [1, 1]} : vector<16x128xf32> to vector<16x64xf32>
    %cst_80 = arith.constant 5.000000e-01 : f32
    %244 = vector.broadcast %cst_80 : f32 to vector<16x64xf32>
    %245 = arith.mulf %244, %242 : vector<16x64xf32>
    %cst_81 = arith.constant 4.471500e-02 : f32
    %246 = vector.broadcast %cst_81 : f32 to vector<16x64xf32>
    %247 = arith.mulf %246, %242 : vector<16x64xf32>
    %248 = arith.mulf %247, %242 : vector<16x64xf32>
    %249 = arith.mulf %248, %242 : vector<16x64xf32>
    %250 = arith.addf %242, %249 : vector<16x64xf32>
    %cst_82 = arith.constant 0.797884583 : f32
    %251 = vector.broadcast %cst_82 : f32 to vector<16x64xf32>
    %252 = arith.mulf %251, %250 : vector<16x64xf32>
    %253 = math.tanh %252 : vector<16x64xf32>
    %cst_83 = arith.constant 1.000000e+00 : f32
    %254 = vector.broadcast %cst_83 : f32 to vector<16x64xf32>
    %255 = arith.addf %254, %253 : vector<16x64xf32>
    %256 = arith.mulf %245, %255 : vector<16x64xf32>
    %257 = arith.mulf %256, %243 : vector<16x64xf32>
    %258 = vector.extract_strided_slice %141 {offsets = [32, 0], sizes = [64, 32], strides = [1, 1]} : vector<96x32xf32> to vector<64x32xf32>
    %cst_84 = arith.constant dense<0.000000e+00> : vector<16x32xf32>
    %259 = tpu.matmul %257, %258, %cst_84 {dimension_numbers = #tpu.dot_dimension_numbers<[1], [0], [0], [1], [0, 0, 1, 1], [], []>} : vector<16x64xf32>, vector<64x32xf32>, vector<16x32xf32> -> vector<16x32xf32>
    %260 = arith.addf %223, %259 : vector<16x32xf32>
    %c4 = arith.constant 4 : index
    %c0_85 = arith.constant 0 : index
    %c0_86 = arith.constant 0 : index
    %261 = vector.load %arg5[%c4, %c0_85, %c0_86] : memref<5x1x32xf32, #tpu.memory_space<vmem>>, vector<1x1x32xf32>
    %262 = vector.shape_cast %261 : vector<1x1x32xf32> to vector<1x32xf32>
    %263 = arith.mulf %260, %260 : vector<16x32xf32>
    %cst_87 = arith.constant dense<0.000000e+00> : vector<16xf32>
    %264 = vector.multi_reduction <add>, %263, %cst_87 [1] : vector<16x32xf32> to vector<16xf32>
    %265 = vector.shape_cast %264 : vector<16xf32> to vector<16x1xf32>
    %cst_88 = arith.constant 3.200000e+01 : f32
    %266 = vector.broadcast %cst_88 : f32 to vector<16x1xf32>
    %267 = arith.divf %265, %266 : vector<16x1xf32>
    %cst_89 = arith.constant 9.99999997E-7 : f32
    %268 = vector.broadcast %cst_89 : f32 to vector<16x1xf32>
    %269 = arith.addf %267, %268 : vector<16x1xf32>
    %270 = math.rsqrt %269 : vector<16x1xf32>
    %271 = vector.broadcast %270 : vector<16x1xf32> to vector<16x32xf32>
    %272 = arith.mulf %260, %271 : vector<16x32xf32>
    %cst_90 = arith.constant 1.000000e+00 : f32
    %273 = vector.broadcast %cst_90 : f32 to vector<1x32xf32>
    %274 = arith.addf %273, %262 : vector<1x32xf32>
    %275 = vector.broadcast %274 : vector<1x32xf32> to vector<16x32xf32>
    %276 = arith.mulf %272, %275 : vector<16x32xf32>
    %c0_91 = arith.constant 0 : index
    %c0_92 = arith.constant 0 : index
    %277 = vector.load %arg2[%c0_91, %c0_92] : memref<32x128xf32, #tpu.memory_space<vmem>>, vector<32x128xf32>
    %cst_93 = arith.constant dense<0.000000e+00> : vector<16x128xf32>
    %278 = tpu.matmul %276, %277, %cst_93 {dimension_numbers = #tpu.dot_dimension_numbers<[1], [0], [0], [1], [0, 0, 1, 1], [], []>} : vector<16x32xf32>, vector<32x128xf32>, vector<16x128xf32> -> vector<16x128xf32>
    %c0_94 = arith.constant 0 : index
    %c0_95 = arith.constant 0 : index
    %279 = vector.load %arg8[%c0_94, %c0_95] : memref<16x128xf32, #tpu.memory_space<vmem>>, vector<16x128xf32>
    tpu.vector_store %arg8[%c0_94, %c0_95], %278 {strides = array<i32>} : memref<16x128xf32, #tpu.memory_space<vmem>>, vector<16x128xf32>,
    return
  }
}

</mosaic_0001>

<llo_original>
// kernel: _gemma_forward_jit.1
$region0: #{_gemma_forward_jit.1}
  #allocation0 [shape = 'u32[]', space=smem, size = 0x4, offset = 0x4, fixed_abs, tag = 'smem constant byte address 0x4 - core index']
  #allocation1 [shape = 'u32[144,128]{1,0:T(1,128)}', space=vmem, size = 0x12000, scoped, tag = 'internal scratch']
  %s0 = inlined_call_operand.vmem [shape: s32[16,1], index: 0, kind: input, shape index: {}]
  %s1 = inlined_call_operand.vmem [shape: f32[64,32], index: 1, kind: input, shape index: {}]
  %s2 = inlined_call_operand.vmem [shape: f32[32,128], index: 2, kind: input, shape index: {}]
  %s3 = inlined_call_operand.vmem [shape: f32[2,16,16], index: 3, kind: input, shape index: {}]
  %s4 = inlined_call_operand.vmem [shape: f32[16,16], index: 4, kind: input, shape index: {}]
  %s5 = inlined_call_operand.vmem [shape: f32[5,1,32], index: 5, kind: input, shape index: {}]
  %s6 = inlined_call_operand.vmem [shape: f32[2,32,224], index: 6, kind: input, shape index: {}]
  %s7 = inlined_call_operand.vmem [shape: f32[2,96,32], index: 7, kind: input, shape index: {}]
  %s8 = inlined_call_operand.vmem [shape: f32[16,128], index: 8, kind: output, shape index: {}]
  %s9 = sld [smem:[#allocation0]]
  $region42: #{_gemma_forward_jit.1} parent=0
    _
  %s11 = ssub.s32 1, %s9
  %s12 = scalar_select 0, %s11, %s9
  // Predicated region
  $region2: #{_gemma_forward_jit.1} parent=0 // pred_check
    _
  $region3: #{_gemma_forward_jit.1} parent=0 // pred_check_branch
    %14 = sbr.rel (0) target = $region5
  $region4: #{_gemma_forward_jit.1} parent=0 // pred_region
    _
  $region5: #{_gemma_forward_jit.1} parent=0 // pred_fallthru
    _
  // Predicated region
  $region6: #{_gemma_forward_jit.1} parent=0 // pred_check
    _
  $region7: #{_gemma_forward_jit.1} parent=0 // pred_check_branch
    %16 = sbr.rel (0) target = $region9
  $region8: #{_gemma_forward_jit.1} parent=0 // pred_region
    _
  $region9: #{_gemma_forward_jit.1} parent=0 // pred_fallthru
    _
  // Predicated region
  $region10: #{_gemma_forward_jit.1} parent=0 // pred_check
    _
  $region11: #{_gemma_forward_jit.1} parent=0 // pred_check_branch
    %18 = sbr.rel (0) target = $region13
  $region12: #{_gemma_forward_jit.1} parent=0 // pred_region
    _
  $region13: #{_gemma_forward_jit.1} parent=0 // pred_fallthru
    _
  // Predicated region
  $region14: #{_gemma_forward_jit.1} parent=0 // pred_check
    _
  $region15: #{_gemma_forward_jit.1} parent=0 // pred_check_branch
    %20 = sbr.rel (0) target = $region17
  $region16: #{_gemma_forward_jit.1} parent=0 // pred_region
    _
  $region17: #{_gemma_forward_jit.1} parent=0 // pred_fallthru
    _
  // Predicated region
  $region18: #{_gemma_forward_jit.1} parent=0 // pred_check
    _
  $region19: #{_gemma_forward_jit.1} parent=0 // pred_check_branch
    %22 = sbr.rel (0) target = $region21
  $region20: #{_gemma_forward_jit.1} parent=0 // pred_region
    _
  $region21: #{_gemma_forward_jit.1} parent=0 // pred_fallthru
    _
  // Predicated region
  $region22: #{_gemma_forward_jit.1} parent=0 // pred_check
    _
  $region23: #{_gemma_forward_jit.1} parent=0 // pred_check_branch
    %24 = sbr.rel (0) target = $region25
  $region24: #{_gemma_forward_jit.1} parent=0 // pred_region
    _
  $region25: #{_gemma_forward_jit.1} parent=0 // pred_fallthru
    _
  // Predicated region
  $region26: #{_gemma_forward_jit.1} parent=0 // pred_check
    _
  $region27: #{_gemma_forward_jit.1} parent=0 // pred_check_branch
    %26 = sbr.rel (0) target = $region29
  $region28: #{_gemma_forward_jit.1} parent=0 // pred_region
    _
  $region29: #{_gemma_forward_jit.1} parent=0 // pred_fallthru
    _
  // Predicated region
  $region30: #{_gemma_forward_jit.1} parent=0 // pred_check
    _
  $region31: #{_gemma_forward_jit.1} parent=0 // pred_check_branch
    %28 = sbr.rel (0) target = $region33
  $region32: #{_gemma_forward_jit.1} parent=0 // pred_region
    _
  $region33: #{_gemma_forward_jit.1} parent=0 // pred_fallthru
    _
  %v29 = vld [vmem:[%s3] sm:$0xff]
  %v30 = vld [vmem:[%s3 + $0x8] sm:$0xff]
  %s31 = scalar_lea.vmem %s3, 16
  %v32 = vld [vmem:[%s31] sm:$0xff]
  %v33 = vld [vmem:[%s31 + $0x8] sm:$0xff]
  %v34 = vld [vmem:[%s4] sm:$0xff]
  %v35 = vld [vmem:[%s4 + $0x8] sm:$0xff]
  %v36 = vld [vmem:[%s0] sm:$0xff]
  %v37 = vld [vmem:[%s0 + $0x8] sm:$0xff]
  %v38 = vlaneseq
  %v39 = vand.u32 %v38, 127
  %40 = vset.pattern.permute.xlu0 0
  %41 = vperm.xlu0 %40, %v36
  %v42 = vpop.permute.xlu0 %41
  %43 = vset.pattern.permute.xlu0 0
  %44 = vperm.xlu0 %43, %v37
  %v45 = vpop.permute.xlu0 %44
  %vm46 = vcmp.eq.s32.totalorder %v39, %v42
  %vm47 = vcmp.eq.s32.totalorder %v39, %v45
  %v48 = vsel %vm46, 1, 0
  %v49 = vsel %vm47, 1, 0
  %v50 = vcvt.s32.f32 %v48
  %v51 = vcvt.s32.f32 %v49
  %v52 = vld [vmem:[%s1] sm:$0xff]
  %v53 = vld [vmem:[%s1 + $0x8] sm:$0xff]
  %v54 = vld [vmem:[%s1 + $0x10] sm:$0xff]
  %v55 = vld [vmem:[%s1 + $0x18] sm:$0xff]
  %v56 = vld [vmem:[%s1 + $0x20] sm:$0xff]
  %v57 = vld [vmem:[%s1 + $0x28] sm:$0xff]
  %v58 = vld [vmem:[%s1 + $0x30] sm:$0xff]
  %v59 = vld [vmem:[%s1 + $0x38] sm:$0xff]
  %vm60 = vcmask 523264
  %v62 = vsel %vm60, %v50, 0
  %v65 = vsel %vm60, %v51, 0
  %67 = vmatprep.subr.mxu0 0.0
  %68 = vmatpush1.msra.mxu0 %v52
  %69 = vmatprep.subr.mxu0 0.0
  %70 = vmatpush1.msra.mxu0 %v53
  %71 = vmatprep.subr.mxu0 0.0
  %72 = vmatpush1.msra.mxu0 %v54
  %73 = vmatprep.subr.mxu0 0.0
  %74 = vmatpush1.msra.mxu0 %v55
  %75 = vmatprep.subr.mxu0 0.0
  %76 = vmatpush1.msra.mxu0 %v56
  %77 = vmatprep.subr.mxu0 0.0
  %78 = vmatpush1.msra.mxu0 %v57
  %79 = vmatprep.subr.mxu0 0.0
  %80 = vmatpush1.msra.mxu0 %v58
  %81 = vmatprep.subr.mxu0 0.0
  %82 = vmatpush1.msra.mxu0 %v59
  %83 = vmatprep.subr.mxu0 0.0
  %84 = vmatpush1.msra.mxu0 0.0
  %85 = vmatprep.subr.mxu0 0.0
  %86 = vmatpush1.msra.mxu0 0.0
  %87 = vmatprep.subr.mxu0 0.0
  %88 = vmatpush1.msra.mxu0 0.0
  %89 = vmatprep.subr.mxu0 0.0
  %90 = vmatpush1.msra.mxu0 0.0
  %91 = vmatprep.subr.mxu0 0.0
  %92 = vmatpush1.msra.mxu0 0.0
  %93 = vmatprep.subr.mxu0 0.0
  %94 = vmatpush1.msra.mxu0 0.0
  %95 = vmatprep.subr.mxu0 0.0
  %96 = vmatpush1.msra.mxu0 0.0
  %97 = vmatprep.subr.mxu0 0.0
  %98 = vmatpush1.msra.mxu0 0.0
  %99 = vmatprep.subr.mxu0 0.0
  %100 = vmatpush1.msra.mxu0 0.0
  %101 = vmatprep.subr.mxu0 0.0
  %102 = vmatpush1.msra.mxu0 0.0
  %103 = vmatprep.subr.mxu0 0.0
  %104 = vmatpush1.msra.mxu0 0.0
  %105 = vmatprep.subr.mxu0 0.0
  %106 = vmatpush1.msra.mxu0 0.0
  %107 = vmatprep.subr.mxu0 0.0
  %108 = vmatpush1.msra.mxu0 0.0
  %109 = vmatprep.subr.mxu0 0.0
  %110 = vmatpush1.msra.mxu0 0.0
  %111 = vmatprep.subr.mxu0 0.0
  %112 = vmatpush1.msra.mxu0 0.0
  %113 = vmatprep.subr.mxu0 0.0
  %114 = vmatpush1.msra.mxu0 0.0
  %115 = vmatprep.subr.mxu0 0.0
  %116 = vmatpush1.msra.mxu0 0.0
  %117 = vmatprep.subr.mxu0 0.0
  %118 = vmatpush1.msra.mxu0 0.0
  %119 = vmatprep.subr.mxu0 0.0
  %120 = vmatpush1.msra.mxu0 0.0
  %121 = vmatprep.subr.mxu0 0.0
  %122 = vmatpush1.msra.mxu0 0.0
  %123 = vmatprep.subr.mxu0 0.0
  %124 = vmatpush1.msra.mxu0 0.0
  %125 = vmatprep.subr.mxu0 0.0
  %126 = vmatpush1.msra.mxu0 0.0
  %127 = vmatprep.subr.mxu0 0.0
  %128 = vmatpush1.msra.mxu0 0.0
  %129 = vmatprep.subr.mxu0 0.0
  %130 = vmatpush1.msra.mxu0 0.0
  %131 = vmatprep.mubr.f32.mxu0 0.0
  %132 = vmatmul.mubr.f32.gmra.mrb[0].mxu0 %v62
  %v133 = vpop.f32.mrb[0].mxu0
  %v134 = vadd.f32 0.0, %v133
  %v135 = vpop.f32.mrb[0].mxu0
  %136 = vmatprep.mubr.f32.mxu0 0.0
  %137 = vmatmul.mubr.f32.gmra.mrb[0].mxu0 %v65
  %v138 = vpop.f32.mrb[0].mxu0
  %v139 = vadd.f32 0.0, %v138
  %v140 = vpop.f32.mrb[0].mxu0
  %141 = vdwg.mxu0
  %v142 = vmul.f32 %v134, 5.656854
  %v143 = vmul.f32 %v139, 5.656854
  %v144 = vld [vmem:[%s6] sm:$0xff]
  %v145 = vld [vmem:[%s6 + $0x8] sm:$0xff]
  %v146 = vld [vmem:[%s6 + $0x10] sm:$0xff]
  %v147 = vld [vmem:[%s6 + $0x18] sm:$0xff]
  %v148 = vld [vmem:[%s6 + $0x20] sm:$0xff]
  %v149 = vld [vmem:[%s6 + $0x28] sm:$0xff]
  %v150 = vld [vmem:[%s6 + $0x30] sm:$0xff]
  %v151 = vld [vmem:[%s6 + $0x38] sm:$0xff]
  %v152 = vld [vmem:[%s7] sm:$0xff]
  %v153 = vld [vmem:[%s7 + $0x8] sm:$0xff]
  %v154 = vld [vmem:[%s7 + $0x10] sm:$0xff]
  %v155 = vld [vmem:[%s7 + $0x18] sm:$0xff]
  %v156 = vld [vmem:[%s7 + $0x20] sm:$0xff]
  %v157 = vld [vmem:[%s7 + $0x28] sm:$0xff]
  %v158 = vld [vmem:[%s7 + $0x30] sm:$0xff]
  %v159 = vld [vmem:[%s7 + $0x38] sm:$0xff]
  %v160 = vld [vmem:[%s7 + $0x40] sm:$0xff]
  %v161 = vld [vmem:[%s7 + $0x48] sm:$0xff]
  %v162 = vld [vmem:[%s7 + $0x50] sm:$0xff]
  %v163 = vld [vmem:[%s7 + $0x58] sm:$0xff]
  %v164 = vld [vmem:[%s5] sm:$0x1]
  %v165 = vmul.f32 %v142, %v142
  %v166 = vmul.f32 %v143, %v143
  %vm167 = vcmask 261120
  %v168 = vsel %vm167, %v165, 0.0
  %169 = vadd.xlane.f32.xlu0 %v168
  %v170 = vpop.xlane.xlu0 %169
  %v171 = vsel %vm167, %v166, 0.0
  %172 = vadd.xlane.f32.xlu0 %v171
  %v173 = vpop.xlane.xlu0 %172
  %v174 = vrcp.pop 32.0
  %v175 = vmul.f32 %v170, %v174
  %v176 = vmul.f32 %v173, %v174
  %v177 = vadd.f32 %v175, 1e-06
  %v178 = vadd.f32 %v176, 1e-06
  %v179 = vrsqrt.pop %v177
  %v180 = vrsqrt.pop %v178
  %v181 = vmul.f32 %v142, %v179
  %v182 = vmul.f32 %v143, %v180
  %v183 = vadd.f32 %v164, 1.0
  %v185 = vlaneseq
  %v186 = vshrl.u32 %v185, 7
  %v187 = vsub.s32 0, %v186
  %v188 = vrot.slane %v183, %v187
  %v190 = vmul.f32 %v181, %v188
  %v191 = vmul.f32 %v182, %v188
  %v193 = vsel %vm167, %v190, 0
  %v196 = vsel %vm167, %v191, 0
  %198 = vmatprep.subr.mxu0 0.0
  %199 = vmatpush1.msra.mxu0 %v145
  %200 = vmatprep.subr.mxu0 0.0
  %201 = vmatpush1.msra.mxu0 %v147
  %202 = vmatprep.subr.mxu0 0.0
  %203 = vmatpush1.msra.mxu0 %v149
  %204 = vmatprep.subr.mxu0 0.0
  %205 = vmatpush1.msra.mxu0 %v151
  %206 = vmatprep.subr.mxu0 0.0
  %207 = vmatpush1.msra.mxu0 0.0
  %208 = vmatprep.subr.mxu0 0.0
  %209 = vmatpush1.msra.mxu0 0.0
  %210 = vmatprep.subr.mxu0 0.0
  %211 = vmatpush1.msra.mxu0 0.0
  %212 = vmatprep.subr.mxu0 0.0
  %213 = vmatpush1.msra.mxu0 0.0
  %214 = vmatprep.subr.mxu0 0.0
  %215 = vmatpush1.msra.mxu0 0.0
  %216 = vmatprep.subr.mxu0 0.0
  %217 = vmatpush1.msra.mxu0 0.0
  %218 = vmatprep.subr.mxu0 0.0
  %219 = vmatpush1.msra.mxu0 0.0
  %220 = vmatprep.subr.mxu0 0.0
  %221 = vmatpush1.msra.mxu0 0.0
  %222 = vmatprep.subr.mxu0 0.0
  %223 = vmatpush1.msra.mxu0 0.0
  %224 = vmatprep.subr.mxu0 0.0
  %225 = vmatpush1.msra.mxu0 0.0
  %226 = vmatprep.subr.mxu0 0.0
  %227 = vmatpush1.msra.mxu0 0.0
  %228 = vmatprep.subr.mxu0 0.0
  %229 = vmatpush1.msra.mxu0 0.0
  %230 = vmatprep.subr.mxu0 0.0
  %231 = vmatpush1.msra.mxu0 0.0
  %232 = vmatprep.subr.mxu0 0.0
  %233 = vmatpush1.msra.mxu0 0.0
  %234 = vmatprep.subr.mxu0 0.0
  %235 = vmatpush1.msra.mxu0 0.0
  %236 = vmatprep.subr.mxu0 0.0
  %237 = vmatpush1.msra.mxu0 0.0
  %238 = vmatprep.subr.mxu0 0.0
  %239 = vmatpush1.msra.mxu0 0.0
  %240 = vmatprep.subr.mxu0 0.0
  %241 = vmatpush1.msra.mxu0 0.0
  %242 = vmatprep.subr.mxu0 0.0
  %243 = vmatpush1.msra.mxu0 0.0
  %244 = vmatprep.subr.mxu0 0.0
  %245 = vmatpush1.msra.mxu0 0.0
  %246 = vmatprep.subr.mxu0 0.0
  %247 = vmatpush1.msra.mxu0 0.0
  %248 = vmatprep.subr.mxu0 0.0
  %249 = vmatpush1.msra.mxu0 0.0
  %250 = vmatprep.subr.mxu0 0.0
  %251 = vmatpush1.msra.mxu0 0.0
  %252 = vmatprep.subr.mxu0 0.0
  %253 = vmatpush1.msra.mxu0 0.0
  %254 = vmatprep.subr.mxu0 0.0
  %255 = vmatpush1.msra.mxu0 0.0
  %256 = vmatprep.subr.mxu0 0.0
  %257 = vmatpush1.msra.mxu0 0.0
  %258 = vmatprep.subr.mxu0 0.0
  %259 = vmatpush1.msra.mxu0 0.0
  %260 = vmatprep.subr.mxu0 0.0
  %261 = vmatpush1.msra.mxu0 0.0
  %262 = vmatprep.mubr.f32.mxu0 0.0
  %263 = vmatmul.mubr.f32.gmra.mrb[0].mxu0 %v193
  %v264 = vpop.f32.mrb[0].mxu0
  %v265 = vadd.f32 0.0, %v264
  %v266 = vpop.f32.mrb[0].mxu0
  %267 = vmatprep.mubr.f32.mxu0 0.0
  %268 = vmatmul.mubr.f32.gmra.mrb[0].mxu0 %v196
  %v269 = vpop.f32.mrb[0].mxu0
  %v270 = vadd.f32 0.0, %v269
  %v271 = vpop.f32.mrb[0].mxu0
  %272 = vdwg.mxu0
  %275 = vrot.lane.b32.xlu0 %v265, 120
  %v276 = vpop.permute.xlu0 %275
  %277 = vrot.lane.b32.xlu0 %v270, 120
  %v278 = vpop.permute.xlu0 %277
  %281 = vrot.lane.b32.xlu0 %v265, 8
  %v282 = vpop.permute.xlu0 %281
  %283 = vrot.lane.b32.xlu0 %v270, 8
  %v284 = vpop.permute.xlu0 %283
  %vm287 = vcmask 64512
  %v288 = vsel %vm287, %v276, %v282
  %v289 = vsel %vm287, %v278, %v284
  %v290 = vmul.f32 %v265, %v29
  %v291 = vmul.f32 %v270, %v30
  %v292 = vmul.f32 %v288, %v32
  %v293 = vmul.f32 %v289, %v33
  %v294 = vadd.f32 %v290, %v292
  %v295 = vadd.f32 %v291, %v293
  %296 = vrot.lane.b32.xlu0 %v265, 88
  %v297 = vpop.permute.xlu0 %296
  %298 = vrot.lane.b32.xlu0 %v270, 88
  %v299 = vpop.permute.xlu0 %298
  %302 = vrot.lane.b32.xlu0 %v265, 104
  %v303 = vpop.permute.xlu0 %302
  %304 = vrot.lane.b32.xlu0 %v270, 104
  %v305 = vpop.permute.xlu0 %304
  %v308 = vsel %vm287, %v297, %v303
  %v309 = vsel %vm287, %v299, %v305
  %312 = vrot.lane.b32.xlu0 %v29, 32
  %v313 = vpop.permute.xlu0 %312
  %314 = vrot.lane.b32.xlu0 %v30, 32
  %v315 = vpop.permute.xlu0 %314
  %v318 = vmul.f32 %v265, %v313
  %v319 = vmul.f32 %v270, %v315
  %v320 = vmul.f32 %v308, %v32
  %v321 = vmul.f32 %v309, %v33
  %324 = vrot.lane.b32.xlu0 %v320, 32
  %v325 = vpop.permute.xlu0 %324
  %326 = vrot.lane.b32.xlu0 %v321, 32
  %v327 = vpop.permute.xlu0 %326
  %v330 = vadd.f32 %v318, %v325
  %v331 = vadd.f32 %v319, %v327
  %334 = vrot.lane.b32.xlu0 %v330, 96
  %v335 = vpop.permute.xlu0 %334
  %336 = vrot.lane.b32.xlu0 %v331, 96
  %v337 = vpop.permute.xlu0 %336
  %vm338 = vcmask 130048
  %v340 = vsel %vm338, %v294, 0
  %v343 = vsel %vm338, %v295, 0
  %v345 = vsel %vm338, %v335, 0
  %v347 = vsel %vm338, %v337, 0
  %349 = vmatprep.subr.mxu0 0.0
  %350 = vmatpush1.xpose.msra.mxu0 %v345
  %351 = vmatprep.subr.mxu0 0.0
  %352 = vmatpush1.xpose.msra.mxu0 %v347
  %353 = vmatprep.subr.mxu0 0.0
  %354 = vmatpush1.xpose.msra.mxu0 0.0
  %355 = vmatprep.subr.mxu0 0.0
  %356 = vmatpush1.xpose.msra.mxu0 0.0
  %357 = vmatprep.subr.mxu0 0.0
  %358 = vmatpush1.xpose.msra.mxu0 0.0
  %359 = vmatprep.subr.mxu0 0.0
  %360 = vmatpush1.xpose.msra.mxu0 0.0
  %361 = vmatprep.subr.mxu0 0.0
  %362 = vmatpush1.xpose.msra.mxu0 0.0
  %363 = vmatprep.subr.mxu0 0.0
  %364 = vmatpush1.xpose.msra.mxu0 0.0
  %365 = vmatprep.subr.mxu0 0.0
  %366 = vmatpush1.xpose.msra.mxu0 0.0
  %367 = vmatprep.subr.mxu0 0.0
  %368 = vmatpush1.xpose.msra.mxu0 0.0
  %369 = vmatprep.subr.mxu0 0.0
  %370 = vmatpush1.xpose.msra.mxu0 0.0
  %371 = vmatprep.subr.mxu0 0.0
  %372 = vmatpush1.xpose.msra.mxu0 0.0
  %373 = vmatprep.subr.mxu0 0.0
  %374 = vmatpush1.xpose.msra.mxu0 0.0
  %375 = vmatprep.subr.mxu0 0.0
  %376 = vmatpush1.xpose.msra.mxu0 0.0
  %377 = vmatprep.subr.mxu0 0.0
  %378 = vmatpush1.xpose.msra.mxu0 0.0
  %379 = vmatprep.subr.mxu0 0.0
  %380 = vmatpush1.xpose.msra.mxu0 0.0
  %381 = vmatprep.subr.mxu0 0.0
  %382 = vmatpush1.xpose.msra.mxu0 0.0
  %383 = vmatprep.subr.mxu0 0.0
  %384 = vmatpush1.xpose.msra.mxu0 0.0
  %385 = vmatprep.subr.mxu0 0.0
  %386 = vmatpush1.xpose.msra.mxu0 0.0
  %387 = vmatprep.subr.mxu0 0.0
  %388 = vmatpush1.xpose.msra.mxu0 0.0
  %389 = vmatprep.subr.mxu0 0.0
  %390 = vmatpush1.xpose.msra.mxu0 0.0
  %391 = vmatprep.subr.mxu0 0.0
  %392 = vmatpush1.xpose.msra.mxu0 0.0
  %393 = vmatprep.subr.mxu0 0.0
  %394 = vmatpush1.xpose.msra.mxu0 0.0
  %395 = vmatprep.subr.mxu0 0.0
  %396 = vmatpush1.xpose.msra.mxu0 0.0
  %397 = vmatprep.subr.mxu0 0.0
  %398 = vmatpush1.xpose.msra.mxu0 0.0
  %399 = vmatprep.subr.mxu0 0.0
  %400 = vmatpush1.xpose.msra.mxu0 0.0
  %401 = vmatprep.subr.mxu0 0.0
  %402 = vmatpush1.xpose.msra.mxu0 0.0
  %403 = vmatprep.subr.mxu0 0.0
  %404 = vmatpush1.xpose.msra.mxu0 0.0
  %405 = vmatprep.subr.mxu0 0.0
  %406 = vmatpush1.xpose.msra.mxu0 0.0
  %407 = vmatprep.subr.mxu0 0.0
  %408 = vmatpush1.xpose.msra.mxu0 0.0
  %409 = vmatprep.subr.mxu0 0.0
  %410 = vmatpush1.xpose.msra.mxu0 0.0
  %411 = vmatprep.subr.mxu0 0.0
  %412 = vmatpush1.xpose.msra.mxu0 0.0
  %413 = vmatprep.mubr.f32.mxu0 0.0
  %414 = vmatmul.mubr.f32.gmra.mrb[0].mxu0 %v340
  %v415 = vpop.f32.mrb[0].mxu0
  %v416 = vadd.f32 0.0, %v415
  %v417 = vpop.f32.mrb[0].mxu0
  %418 = vmatprep.mubr.f32.mxu0 0.0
  %419 = vmatmul.mubr.f32.gmra.mrb[0].mxu0 %v343
  %v420 = vpop.f32.mrb[0].mxu0
  %v421 = vadd.f32 0.0, %v420
  %v422 = vpop.f32.mrb[0].mxu0
  %423 = vdwg.mxu0
  %v424 = vmul.f32 %v416, 0.25
  %v425 = vmul.f32 %v421, 0.25
  %v426 = vadd.f32 %v424, %v34
  %v427 = vadd.f32 %v425, %v35
  %v428 = vsel %vm338, %v426, -inf
  %429 = vmax.xlane.f32.xlu0 %v428
  %v430 = vpop.xlane.xlu0 %429
  %v431 = vsel %vm338, %v427, -inf
  %432 = vmax.xlane.f32.xlu0 %v431
  %v433 = vpop.xlane.xlu0 %432
  %v434 = vsub.f32 %v426, %v430
  %v435 = vsub.f32 %v427, %v433
  %v436 = vmul.f32 %v434, 1.442695
  %v437 = vpow.pop %v436
  %v438 = vmul.f32 %v435, 1.442695
  %v439 = vpow.pop %v438
  %v440 = vsel %vm338, %v437, 0.0
  %441 = vadd.xlane.f32.xlu0 %v440
  %v442 = vpop.xlane.xlu0 %441
  %v443 = vsel %vm338, %v439, 0.0
  %444 = vadd.xlane.f32.xlu0 %v443
  %v445 = vpop.xlane.xlu0 %444
  %v446 = vrcp.pop %v442
  %v447 = vrcp.pop %v445
  %448 = vrot.lane.b32.xlu0 %v265, 64
  %v449 = vpop.permute.xlu0 %448
  %450 = vrot.lane.b32.xlu0 %v270, 64
  %v451 = vpop.permute.xlu0 %450
  %v455 = vsel %vm338, %v437, 0
  %v458 = vsel %vm338, %v439, 0
  %460 = vmatprep.subr.mxu0 0.0
  %461 = vmatpush1.msra.mxu0 %v449
  %462 = vmatprep.subr.mxu0 0.0
  %463 = vmatpush1.msra.mxu0 %v451
  %464 = vmatprep.subr.mxu0 0.0
  %465 = vmatpush1.msra.mxu0 0.0
  %466 = vmatprep.subr.mxu0 0.0
  %467 = vmatpush1.msra.mxu0 0.0
  %468 = vmatprep.subr.mxu0 0.0
  %469 = vmatpush1.msra.mxu0 0.0
  %470 = vmatprep.subr.mxu0 0.0
  %471 = vmatpush1.msra.mxu0 0.0
  %472 = vmatprep.subr.mxu0 0.0
  %473 = vmatpush1.msra.mxu0 0.0
  %474 = vmatprep.subr.mxu0 0.0
  %475 = vmatpush1.msra.mxu0 0.0
  %476 = vmatprep.subr.mxu0 0.0
  %477 = vmatpush1.msra.mxu0 0.0
  %478 = vmatprep.subr.mxu0 0.0
  %479 = vmatpush1.msra.mxu0 0.0
  %480 = vmatprep.subr.mxu0 0.0
  %481 = vmatpush1.msra.mxu0 0.0
  %482 = vmatprep.subr.mxu0 0.0
  %483 = vmatpush1.msra.mxu0 0.0
  %484 = vmatprep.subr.mxu0 0.0
  %485 = vmatpush1.msra.mxu0 0.0
  %486 = vmatprep.subr.mxu0 0.0
  %487 = vmatpush1.msra.mxu0 0.0
  %488 = vmatprep.subr.mxu0 0.0
  %489 = vmatpush1.msra.mxu0 0.0
  %490 = vmatprep.subr.mxu0 0.0
  %491 = vmatpush1.msra.mxu0 0.0
  %492 = vmatprep.subr.mxu0 0.0
  %493 = vmatpush1.msra.mxu0 0.0
  %494 = vmatprep.subr.mxu0 0.0
  %495 = vmatpush1.msra.mxu0 0.0
  %496 = vmatprep.subr.mxu0 0.0
  %497 = vmatpush1.msra.mxu0 0.0
  %498 = vmatprep.subr.mxu0 0.0
  %499 = vmatpush1.msra.mxu0 0.0
  %500 = vmatprep.subr.mxu0 0.0
  %501 = vmatpush1.msra.mxu0 0.0
  %502 = vmatprep.subr.mxu0 0.0
  %503 = vmatpush1.msra.mxu0 0.0
  %504 = vmatprep.subr.mxu0 0.0
  %505 = vmatpush1.msra.mxu0 0.0
  %506 = vmatprep.subr.mxu0 0.0
  %507 = vmatpush1.msra.mxu0 0.0
  %508 = vmatprep.subr.mxu0 0.0
  %509 = vmatpush1.msra.mxu0 0.0
  %510 = vmatprep.subr.mxu0 0.0
  %511 = vmatpush1.msra.mxu0 0.0
  %512 = vmatprep.subr.mxu0 0.0
  %513 = vmatpush1.msra.mxu0 0.0
  %514 = vmatprep.subr.mxu0 0.0
  %515 = vmatpush1.msra.mxu0 0.0
  %516 = vmatprep.subr.mxu0 0.0
  %517 = vmatpush1.msra.mxu0 0.0
  %518 = vmatprep.subr.mxu0 0.0
  %519 = vmatpush1.msra.mxu0 0.0
  %520 = vmatprep.subr.mxu0 0.0
  %521 = vmatpush1.msra.mxu0 0.0
  %522 = vmatprep.subr.mxu0 0.0
  %523 = vmatpush1.msra.mxu0 0.0
  %524 = vmatprep.mubr.f32.mxu0 0.0
  %525 = vmatmul.mubr.f32.gmra.mrb[0].mxu0 %v455
  %v526 = vpop.f32.mrb[0].mxu0
  %v527 = vadd.f32 0.0, %v526
  %v528 = vpop.f32.mrb[0].mxu0
  %529 = vmatprep.mubr.f32.mxu0 0.0
  %530 = vmatmul.mubr.f32.gmra.mrb[0].mxu0 %v458
  %v531 = vpop.f32.mrb[0].mxu0
  %v532 = vadd.f32 0.0, %v531
  %v533 = vpop.f32.mrb[0].mxu0
  %534 = vdwg.mxu0
  %v535 = vmul.f32 %v527, %v446
  %v536 = vmul.f32 %v532, %v447
  %v537 = vsel %vm287, %v303, %v276
  %v538 = vsel %vm287, %v305, %v278
  %539 = vrot.lane.b32.xlu0 %v29, 16
  %v540 = vpop.permute.xlu0 %539
  %541 = vrot.lane.b32.xlu0 %v30, 16
  %v542 = vpop.permute.xlu0 %541
  %v545 = vmul.f32 %v265, %v540
  %v546 = vmul.f32 %v270, %v542
  %v547 = vmul.f32 %v537, %v32
  %v548 = vmul.f32 %v538, %v33
  %551 = vrot.lane.b32.xlu0 %v547, 16
  %v552 = vpop.permute.xlu0 %551
  %553 = vrot.lane.b32.xlu0 %v548, 16
  %v554 = vpop.permute.xlu0 %553
  %v557 = vadd.f32 %v545, %v552
  %v558 = vadd.f32 %v546, %v554
  %559 = vrot.lane.b32.xlu0 %v265, 72
  %v560 = vpop.permute.xlu0 %559
  %561 = vrot.lane.b32.xlu0 %v270, 72
  %v562 = vpop.permute.xlu0 %561
  %v565 = vsel %vm287, %v560, %v297
  %v566 = vsel %vm287, %v562, %v299
  %567 = vrot.lane.b32.xlu0 %v29, 48
  %v568 = vpop.permute.xlu0 %567
  %569 = vrot.lane.b32.xlu0 %v30, 48
  %v570 = vpop.permute.xlu0 %569
  %v573 = vmul.f32 %v265, %v568
  %v574 = vmul.f32 %v270, %v570
  %v575 = vmul.f32 %v565, %v32
  %v576 = vmul.f32 %v566, %v33
  %579 = vrot.lane.b32.xlu0 %v575, 48
  %v580 = vpop.permute.xlu0 %579
  %581 = vrot.lane.b32.xlu0 %v576, 48
  %v582 = vpop.permute.xlu0 %581
  %v585 = vadd.f32 %v573, %v580
  %v586 = vadd.f32 %v574, %v582
  %589 = vrot.lane.b32.xlu0 %v557, 112
  %v590 = vpop.permute.xlu0 %589
  %591 = vrot.lane.b32.xlu0 %v558, 112
  %v592 = vpop.permute.xlu0 %591
  %595 = vrot.lane.b32.xlu0 %v585, 80
  %v596 = vpop.permute.xlu0 %595
  %597 = vrot.lane.b32.xlu0 %v586, 80
  %v598 = vpop.permute.xlu0 %597
  %v599 = vsel %vm338, %v590, 0
  %v601 = vsel %vm338, %v592, 0
  %v603 = vsel %vm338, %v596, 0
  %v605 = vsel %vm338, %v598, 0
  %607 = vmatprep.subr.mxu0 0.0
  %608 = vmatpush1.xpose.msra.mxu0 %v603
  %609 = vmatprep.subr.mxu0 0.0
  %610 = vmatpush1.xpose.msra.mxu0 %v605
  %611 = vmatprep.subr.mxu0 0.0
  %612 = vmatpush1.xpose.msra.mxu0 0.0
  %613 = vmatprep.subr.mxu0 0.0
  %614 = vmatpush1.xpose.msra.mxu0 0.0
  %615 = vmatprep.subr.mxu0 0.0
  %616 = vmatpush1.xpose.msra.mxu0 0.0
  %617 = vmatprep.subr.mxu0 0.0
  %618 = vmatpush1.xpose.msra.mxu0 0.0
  %619 = vmatprep.subr.mxu0 0.0
  %620 = vmatpush1.xpose.msra.mxu0 0.0
  %621 = vmatprep.subr.mxu0 0.0
  %622 = vmatpush1.xpose.msra.mxu0 0.0
  %623 = vmatprep.subr.mxu0 0.0
  %624 = vmatpush1.xpose.msra.mxu0 0.0
  %625 = vmatprep.subr.mxu0 0.0
  %626 = vmatpush1.xpose.msra.mxu0 0.0
  %627 = vmatprep.subr.mxu0 0.0
  %628 = vmatpush1.xpose.msra.mxu0 0.0
  %629 = vmatprep.subr.mxu0 0.0
  %630 = vmatpush1.xpose.msra.mxu0 0.0
  %631 = vmatprep.subr.mxu0 0.0
  %632 = vmatpush1.xpose.msra.mxu0 0.0
  %633 = vmatprep.subr.mxu0 0.0
  %634 = vmatpush1.xpose.msra.mxu0 0.0
  %635 = vmatprep.subr.mxu0 0.0
  %636 = vmatpush1.xpose.msra.mxu0 0.0
  %637 = vmatprep.subr.mxu0 0.0
  %638 = vmatpush1.xpose.msra.mxu0 0.0
  %639 = vmatprep.subr.mxu0 0.0
  %640 = vmatpush1.xpose.msra.mxu0 0.0
  %641 = vmatprep.subr.mxu0 0.0
  %642 = vmatpush1.xpose.msra.mxu0 0.0
  %643 = vmatprep.subr.mxu0 0.0
  %644 = vmatpush1.xpose.msra.mxu0 0.0
  %645 = vmatprep.subr.mxu0 0.0
  %646 = vmatpush1.xpose.msra.mxu0 0.0
  %647 = vmatprep.subr.mxu0 0.0
  %648 = vmatpush1.xpose.msra.mxu0 0.0
  %649 = vmatprep.subr.mxu0 0.0
  %650 = vmatpush1.xpose.msra.mxu0 0.0
  %651 = vmatprep.subr.mxu0 0.0
  %652 = vmatpush1.xpose.msra.mxu0 0.0
  %653 = vmatprep.subr.mxu0 0.0
  %654 = vmatpush1.xpose.msra.mxu0 0.0
  %655 = vmatprep.subr.mxu0 0.0
  %656 = vmatpush1.xpose.msra.mxu0 0.0
  %657 = vmatprep.subr.mxu0 0.0
  %658 = vmatpush1.xpose.msra.mxu0 0.0
  %659 = vmatprep.subr.mxu0 0.0
  %660 = vmatpush1.xpose.msra.mxu0 0.0
  %661 = vmatprep.subr.mxu0 0.0
  %662 = vmatpush1.xpose.msra.mxu0 0.0
  %663 = vmatprep.subr.mxu0 0.0
  %664 = vmatpush1.xpose.msra.mxu0 0.0
  %665 = vmatprep.subr.mxu0 0.0
  %666 = vmatpush1.xpose.msra.mxu0 0.0
  %667 = vmatprep.subr.mxu0 0.0
  %668 = vmatpush1.xpose.msra.mxu0 0.0
  %669 = vmatprep.subr.mxu0 0.0
  %670 = vmatpush1.xpose.msra.mxu0 0.0
  %671 = vmatprep.mubr.f32.mxu0 0.0
  %672 = vmatmul.mubr.f32.gmra.mrb[0].mxu0 %v599
  %v673 = vpop.f32.mrb[0].mxu0
  %v674 = vadd.f32 0.0, %v673
  %v675 = vpop.f32.mrb[0].mxu0
  %676 = vmatprep.mubr.f32.mxu0 0.0
  %677 = vmatmul.mubr.f32.gmra.mrb[0].mxu0 %v601
  %v678 = vpop.f32.mrb[0].mxu0
  %v679 = vadd.f32 0.0, %v678
  %v680 = vpop.f32.mrb[0].mxu0
  %681 = vdwg.mxu0
  %v682 = vmul.f32 %v674, 0.25
  %v683 = vmul.f32 %v679, 0.25
  %v684 = vadd.f32 %v682, %v34
  %v685 = vadd.f32 %v683, %v35
  %v686 = vsel %vm338, %v684, -inf
  %687 = vmax.xlane.f32.xlu0 %v686
  %v688 = vpop.xlane.xlu0 %687
  %v689 = vsel %vm338, %v685, -inf
  %690 = vmax.xlane.f32.xlu0 %v689
  %v691 = vpop.xlane.xlu0 %690
  %v692 = vsub.f32 %v684, %v688
  %v693 = vsub.f32 %v685, %v691
  %v694 = vmul.f32 %v692, 1.442695
  %v695 = vpow.pop %v694
  %v696 = vmul.f32 %v693, 1.442695
  %v697 = vpow.pop %v696
  %v698 = vsel %vm338, %v695, 0.0
  %699 = vadd.xlane.f32.xlu0 %v698
  %v700 = vpop.xlane.xlu0 %699
  %v701 = vsel %vm338, %v697, 0.0
  %702 = vadd.xlane.f32.xlu0 %v701
  %v703 = vpop.xlane.xlu0 %702
  %v704 = vrcp.pop %v700
  %v705 = vrcp.pop %v703
  %706 = vrot.lane.b32.xlu0 %v265, 48
  %v707 = vpop.permute.xlu0 %706
  %708 = vrot.lane.b32.xlu0 %v270, 48
  %v709 = vpop.permute.xlu0 %708
  %v713 = vsel %vm338, %v695, 0
  %v716 = vsel %vm338, %v697, 0
  %718 = vmatprep.subr.mxu0 0.0
  %719 = vmatpush1.msra.mxu0 %v707
  %720 = vmatprep.subr.mxu0 0.0
  %721 = vmatpush1.msra.mxu0 %v709
  %722 = vmatprep.subr.mxu0 0.0
  %723 = vmatpush1.msra.mxu0 0.0
  %724 = vmatprep.subr.mxu0 0.0
  %725 = vmatpush1.msra.mxu0 0.0
  %726 = vmatprep.subr.mxu0 0.0
  %727 = vmatpush1.msra.mxu0 0.0
  %728 = vmatprep.subr.mxu0 0.0
  %729 = vmatpush1.msra.mxu0 0.0
  %730 = vmatprep.subr.mxu0 0.0
  %731 = vmatpush1.msra.mxu0 0.0
  %732 = vmatprep.subr.mxu0 0.0
  %733 = vmatpush1.msra.mxu0 0.0
  %734 = vmatprep.subr.mxu0 0.0
  %735 = vmatpush1.msra.mxu0 0.0
  %736 = vmatprep.subr.mxu0 0.0
  %737 = vmatpush1.msra.mxu0 0.0
  %738 = vmatprep.subr.mxu0 0.0
  %739 = vmatpush1.msra.mxu0 0.0
  %740 = vmatprep.subr.mxu0 0.0
  %741 = vmatpush1.msra.mxu0 0.0
  %742 = vmatprep.subr.mxu0 0.0
  %743 = vmatpush1.msra.mxu0 0.0
  %744 = vmatprep.subr.mxu0 0.0
  %745 = vmatpush1.msra.mxu0 0.0
  %746 = vmatprep.subr.mxu0 0.0
  %747 = vmatpush1.msra.mxu0 0.0
  %748 = vmatprep.subr.mxu0 0.0
  %749 = vmatpush1.msra.mxu0 0.0
  %750 = vmatprep.subr.mxu0 0.0
  %751 = vmatpush1.msra.mxu0 0.0
  %752 = vmatprep.subr.mxu0 0.0
  %753 = vmatpush1.msra.mxu0 0.0
  %754 = vmatprep.subr.mxu0 0.0
  %755 = vmatpush1.msra.mxu0 0.0
  %756 = vmatprep.subr.mxu0 0.0
  %757 = vmatpush1.msra.mxu0 0.0
  %758 = vmatprep.subr.mxu0 0.0
  %759 = vmatpush1.msra.mxu0 0.0
  %760 = vmatprep.subr.mxu0 0.0
  %761 = vmatpush1.msra.mxu0 0.0
  %762 = vmatprep.subr.mxu0 0.0
  %763 = vmatpush1.msra.mxu0 0.0
  %764 = vmatprep.subr.mxu0 0.0
  %765 = vmatpush1.msra.mxu0 0.0
  %766 = vmatprep.subr.mxu0 0.0
  %767 = vmatpush1.msra.mxu0 0.0
  %768 = vmatprep.subr.mxu0 0.0
  %769 = vmatpush1.msra.mxu0 0.0
  %770 = vmatprep.subr.mxu0 0.0
  %771 = vmatpush1.msra.mxu0 0.0
  %772 = vmatprep.subr.mxu0 0.0
  %773 = vmatpush1.msra.mxu0 0.0
  %774 = vmatprep.subr.mxu0 0.0
  %775 = vmatpush1.msra.mxu0 0.0
  %776 = vmatprep.subr.mxu0 0.0
  %777 = vmatpush1.msra.mxu0 0.0
  %778 = vmatprep.subr.mxu0 0.0
  %779 = vmatpush1.msra.mxu0 0.0
  %780 = vmatprep.subr.mxu0 0.0
  %781 = vmatpush1.msra.mxu0 0.0
  %782 = vmatprep.mubr.f32.mxu0 0.0
  %783 = vmatmul.mubr.f32.gmra.mrb[0].mxu0 %v713
  %v784 = vpop.f32.mrb[0].mxu0
  %v785 = vadd.f32 0.0, %v784
  %v786 = vpop.f32.mrb[0].mxu0
  %787 = vmatprep.mubr.f32.mxu0 0.0
  %788 = vmatmul.mubr.f32.gmra.mrb[0].mxu0 %v716
  %v789 = vpop.f32.mrb[0].mxu0
  %v790 = vadd.f32 0.0, %v789
  %v791 = vpop.f32.mrb[0].mxu0
  %792 = vdwg.mxu0
  %v793 = vmul.f32 %v785, %v704
  %v794 = vmul.f32 %v790, %v705
  %797 = vrot.lane.b32.xlu0 %v793, 16
  %v798 = vpop.permute.xlu0 %797
  %799 = vrot.lane.b32.xlu0 %v794, 16
  %v800 = vpop.permute.xlu0 %799
  %v803 = vsel %vm338, %v535, %v798
  %v804 = vsel %vm338, %v536, %v800
  %v806 = vsel %vm167, %v803, 0
  %v809 = vsel %vm167, %v804, 0
  %811 = vmatprep.subr.mxu0 0.0
  %812 = vmatpush1.msra.mxu0 %v152
  %813 = vmatprep.subr.mxu0 0.0
  %814 = vmatpush1.msra.mxu0 %v153
  %815 = vmatprep.subr.mxu0 0.0
  %816 = vmatpush1.msra.mxu0 %v154
  %817 = vmatprep.subr.mxu0 0.0
  %818 = vmatpush1.msra.mxu0 %v155
  %819 = vmatprep.subr.mxu0 0.0
  %820 = vmatpush1.msra.mxu0 0.0
  %821 = vmatprep.subr.mxu0 0.0
  %822 = vmatpush1.msra.mxu0 0.0
  %823 = vmatprep.subr.mxu0 0.0
  %824 = vmatpush1.msra.mxu0 0.0
  %825 = vmatprep.subr.mxu0 0.0
  %826 = vmatpush1.msra.mxu0 0.0
  %827 = vmatprep.subr.mxu0 0.0
  %828 = vmatpush1.msra.mxu0 0.0
  %829 = vmatprep.subr.mxu0 0.0
  %830 = vmatpush1.msra.mxu0 0.0
  %831 = vmatprep.subr.mxu0 0.0
  %832 = vmatpush1.msra.mxu0 0.0
  %833 = vmatprep.subr.mxu0 0.0
  %834 = vmatpush1.msra.mxu0 0.0
  %835 = vmatprep.subr.mxu0 0.0
  %836 = vmatpush1.msra.mxu0 0.0
  %837 = vmatprep.subr.mxu0 0.0
  %838 = vmatpush1.msra.mxu0 0.0
  %839 = vmatprep.subr.mxu0 0.0
  %840 = vmatpush1.msra.mxu0 0.0
  %841 = vmatprep.subr.mxu0 0.0
  %842 = vmatpush1.msra.mxu0 0.0
  %843 = vmatprep.subr.mxu0 0.0
  %844 = vmatpush1.msra.mxu0 0.0
  %845 = vmatprep.subr.mxu0 0.0
  %846 = vmatpush1.msra.mxu0 0.0
  %847 = vmatprep.subr.mxu0 0.0
  %848 = vmatpush1.msra.mxu0 0.0
  %849 = vmatprep.subr.mxu0 0.0
  %850 = vmatpush1.msra.mxu0 0.0
  %851 = vmatprep.subr.mxu0 0.0
  %852 = vmatpush1.msra.mxu0 0.0
  %853 = vmatprep.subr.mxu0 0.0
  %854 = vmatpush1.msra.mxu0 0.0
  %855 = vmatprep.subr.mxu0 0.0
  %856 = vmatpush1.msra.mxu0 0.0
  %857 = vmatprep.subr.mxu0 0.0
  %858 = vmatpush1.msra.mxu0 0.0
  %859 = vmatprep.subr.mxu0 0.0
  %860 = vmatpush1.msra.mxu0 0.0
  %861 = vmatprep.subr.mxu0 0.0
  %862 = vmatpush1.msra.mxu0 0.0
  %863 = vmatprep.subr.mxu0 0.0
  %864 = vmatpush1.msra.mxu0 0.0
  %865 = vmatprep.subr.mxu0 0.0
  %866 = vmatpush1.msra.mxu0 0.0
  %867 = vmatprep.subr.mxu0 0.0
  %868 = vmatpush1.msra.mxu0 0.0
  %869 = vmatprep.subr.mxu0 0.0
  %870 = vmatpush1.msra.mxu0 0.0
  %871 = vmatprep.subr.mxu0 0.0
  %872 = vmatpush1.msra.mxu0 0.0
  %873 = vmatprep.subr.mxu0 0.0
  %874 = vmatpush1.msra.mxu0 0.0
  %875 = vmatprep.mubr.f32.mxu0 0.0
  %876 = vmatmul.mubr.f32.gmra.mrb[0].mxu0 %v806
  %v877 = vpop.f32.mrb[0].mxu0
  %v878 = vadd.f32 0.0, %v877
  %v879 = vpop.f32.mrb[0].mxu0
  %880 = vmatprep.mubr.f32.mxu0 0.0
  %881 = vmatmul.mubr.f32.gmra.mrb[0].mxu0 %v809
  %v882 = vpop.f32.mrb[0].mxu0
  %v883 = vadd.f32 0.0, %v882
  %v884 = vpop.f32.mrb[0].mxu0
  %885 = vdwg.mxu0
  %v886 = vadd.f32 %v142, %v878
  %v887 = vadd.f32 %v143, %v883
  %s888 = scalar_lea.vmem %s5, 1
  %v889 = vld [vmem:[%s888] sm:$0x1]
  %v890 = vmul.f32 %v886, %v886
  %v891 = vmul.f32 %v887, %v887
  %v892 = vsel %vm167, %v890, 0.0
  %893 = vadd.xlane.f32.xlu0 %v892
  %v894 = vpop.xlane.xlu0 %893
  %v895 = vsel %vm167, %v891, 0.0
  %896 = vadd.xlane.f32.xlu0 %v895
  %v897 = vpop.xlane.xlu0 %896
  %v898 = vmul.f32 %v894, %v174
  %v899 = vmul.f32 %v897, %v174
  %v900 = vadd.f32 %v898, 1e-06
  %v901 = vadd.f32 %v899, 1e-06
  %v902 = vrsqrt.pop %v900
  %v903 = vrsqrt.pop %v901
  %v904 = vmul.f32 %v886, %v902
  %v905 = vmul.f32 %v887, %v903
  %v906 = vadd.f32 %v889, 1.0
  %v908 = vlaneseq
  %v909 = vshrl.u32 %v908, 7
  %v910 = vsub.s32 0, %v909
  %v911 = vrot.slane %v906, %v910
  %v913 = vmul.f32 %v904, %v911
  %v914 = vmul.f32 %v905, %v911
  %v916 = vsel %vm167, %v913, 0
  %v919 = vsel %vm167, %v914, 0
  %921 = vmatprep.subr.mxu0 0.0
  %922 = vmatpush1.msra.mxu0 %v144
  %923 = vmatprep.subr.mxu0 0.0
  %924 = vmatpush1.msra.mxu0 %v146
  %925 = vmatprep.subr.mxu0 0.0
  %926 = vmatpush1.msra.mxu0 %v148
  %927 = vmatprep.subr.mxu0 0.0
  %928 = vmatpush1.msra.mxu0 %v150
  %929 = vmatprep.subr.mxu0 0.0
  %930 = vmatpush1.msra.mxu0 0.0
  %931 = vmatprep.subr.mxu0 0.0
  %932 = vmatpush1.msra.mxu0 0.0
  %933 = vmatprep.subr.mxu0 0.0
  %934 = vmatpush1.msra.mxu0 0.0
  %935 = vmatprep.subr.mxu0 0.0
  %936 = vmatpush1.msra.mxu0 0.0
  %937 = vmatprep.subr.mxu0 0.0
  %938 = vmatpush1.msra.mxu0 0.0
  %939 = vmatprep.subr.mxu0 0.0
  %940 = vmatpush1.msra.mxu0 0.0
  %941 = vmatprep.subr.mxu0 0.0
  %942 = vmatpush1.msra.mxu0 0.0
  %943 = vmatprep.subr.mxu0 0.0
  %944 = vmatpush1.msra.mxu0 0.0
  %945 = vmatprep.subr.mxu0 0.0
  %946 = vmatpush1.msra.mxu0 0.0
  %947 = vmatprep.subr.mxu0 0.0
  %948 = vmatpush1.msra.mxu0 0.0
  %949 = vmatprep.subr.mxu0 0.0
  %950 = vmatpush1.msra.mxu0 0.0
  %951 = vmatprep.subr.mxu0 0.0
  %952 = vmatpush1.msra.mxu0 0.0
  %953 = vmatprep.subr.mxu0 0.0
  %954 = vmatpush1.msra.mxu0 0.0
  %955 = vmatprep.subr.mxu0 0.0
  %956 = vmatpush1.msra.mxu0 0.0
  %957 = vmatprep.subr.mxu0 0.0
  %958 = vmatpush1.msra.mxu0 0.0
  %959 = vmatprep.subr.mxu0 0.0
  %960 = vmatpush1.msra.mxu0 0.0
  %961 = vmatprep.subr.mxu0 0.0
  %962 = vmatpush1.msra.mxu0 0.0
  %963 = vmatprep.subr.mxu0 0.0
  %964 = vmatpush1.msra.mxu0 0.0
  %965 = vmatprep.subr.mxu0 0.0
  %966 = vmatpush1.msra.mxu0 0.0
  %967 = vmatprep.subr.mxu0 0.0
  %968 = vmatpush1.msra.mxu0 0.0
  %969 = vmatprep.subr.mxu0 0.0
  %970 = vmatpush1.msra.mxu0 0.0
  %971 = vmatprep.subr.mxu0 0.0
  %972 = vmatpush1.msra.mxu0 0.0
  %973 = vmatprep.subr.mxu0 0.0
  %974 = vmatpush1.msra.mxu0 0.0
  %975 = vmatprep.subr.mxu0 0.0
  %976 = vmatpush1.msra.mxu0 0.0
  %977 = vmatprep.subr.mxu0 0.0
  %978 = vmatpush1.msra.mxu0 0.0
  %979 = vmatprep.subr.mxu0 0.0
  %980 = vmatpush1.msra.mxu0 0.0
  %981 = vmatprep.subr.mxu0 0.0
  %982 = vmatpush1.msra.mxu0 0.0
  %983 = vmatprep.subr.mxu0 0.0
  %984 = vmatpush1.msra.mxu0 0.0
  %985 = vmatprep.mubr.f32.mxu0 0.0
  %986 = vmatmul.mubr.f32.gmra.mrb[0].mxu0 %v916
  %v987 = vpop.f32.mrb[0].mxu0
  %v988 = vadd.f32 0.0, %v987
  %v989 = vpop.f32.mrb[0].mxu0
  %990 = vmatprep.mubr.f32.mxu0 0.0
  %991 = vmatmul.mubr.f32.gmra.mrb[0].mxu0 %v919
  %v992 = vpop.f32.mrb[0].mxu0
  %v993 = vadd.f32 0.0, %v992
  %v994 = vpop.f32.mrb[0].mxu0
  %995 = vdwg.mxu0
  %v996 = vmul.f32 %v988, 0.5
  %v997 = vmul.f32 %v993, 0.5
  %v998 = vmul.f32 %v988, 0.044715
  %v999 = vmul.f32 %v993, 0.044715
  %v1000 = vmul.f32 %v998, %v988
  %v1001 = vmul.f32 %v999, %v993
  %v1002 = vmul.f32 %v1000, %v988
  %v1003 = vmul.f32 %v1001, %v993
  %v1004 = vadd.f32 %v988, %v1002
  %v1005 = vadd.f32 %v993, %v1003
  %v1006 = vmul.f32 %v1004, 0.7978846
  %v1007 = vmul.f32 %v1005, 0.7978846
  %v1008 = vtanh.pop %v1006
  %v1009 = vtanh.pop %v1007
  %v1010 = vadd.f32 %v1008, 1.0
  %v1011 = vadd.f32 %v1009, 1.0
  %v1012 = vmul.f32 %v996, %v1010
  %v1013 = vmul.f32 %v997, %v1011
  %1016 = vrot.lane.b32.xlu0 %v988, 64
  %v1017 = vpop.permute.xlu0 %1016
  %1018 = vrot.lane.b32.xlu0 %v993, 64
  %v1019 = vpop.permute.xlu0 %1018
  %v1022 = vmul.f32 %v1012, %v1017
  %v1023 = vmul.f32 %v1013, %v1019
  %v1025 = vsel %vm60, %v1022, 0
  %v1028 = vsel %vm60, %v1023, 0
  %1030 = vmatprep.subr.mxu0 0.0
  %1031 = vmatpush1.msra.mxu0 %v156
  %1032 = vmatprep.subr.mxu0 0.0
  %1033 = vmatpush1.msra.mxu0 %v157
  %1034 = vmatprep.subr.mxu0 0.0
  %1035 = vmatpush1.msra.mxu0 %v158
  %1036 = vmatprep.subr.mxu0 0.0
  %1037 = vmatpush1.msra.mxu0 %v159
  %1038 = vmatprep.subr.mxu0 0.0
  %1039 = vmatpush1.msra.mxu0 %v160
  %1040 = vmatprep.subr.mxu0 0.0
  %1041 = vmatpush1.msra.mxu0 %v161
  %1042 = vmatprep.subr.mxu0 0.0
  %1043 = vmatpush1.msra.mxu0 %v162
  %1044 = vmatprep.subr.mxu0 0.0
  %1045 = vmatpush1.msra.mxu0 %v163
  %1046 = vmatprep.subr.mxu0 0.0
  %1047 = vmatpush1.msra.mxu0 0.0
  %1048 = vmatprep.subr.mxu0 0.0
  %1049 = vmatpush1.msra.mxu0 0.0
  %1050 = vmatprep.subr.mxu0 0.0
  %1051 = vmatpush1.msra.mxu0 0.0
  %1052 = vmatprep.subr.mxu0 0.0
  %1053 = vmatpush1.msra.mxu0 0.0
  %1054 = vmatprep.subr.mxu0 0.0
  %1055 = vmatpush1.msra.mxu0 0.0
  %1056 = vmatprep.subr.mxu0 0.0
  %1057 = vmatpush1.msra.mxu0 0.0
  %1058 = vmatprep.subr.mxu0 0.0
  %1059 = vmatpush1.msra.mxu0 0.0
  %1060 = vmatprep.subr.mxu0 0.0
  %1061 = vmatpush1.msra.mxu0 0.0
  %1062 = vmatprep.subr.mxu0 0.0
  %1063 = vmatpush1.msra.mxu0 0.0
  %1064 = vmatprep.subr.mxu0 0.0
  %1065 = vmatpush1.msra.mxu0 0.0
  %1066 = vmatprep.subr.mxu0 0.0
  %1067 = vmatpush1.msra.mxu0 0.0
  %1068 = vmatprep.subr.mxu0 0.0
  %1069 = vmatpush1.msra.mxu0 0.0
  %1070 = vmatprep.subr.mxu0 0.0
  %1071 = vmatpush1.msra.mxu0 0.0
  %1072 = vmatprep.subr.mxu0 0.0
  %1073 = vmatpush1.msra.mxu0 0.0
  %1074 = vmatprep.subr.mxu0 0.0
  %1075 = vmatpush1.msra.mxu0 0.0
  %1076 = vmatprep.subr.mxu0 0.0
  %1077 = vmatpush1.msra.mxu0 0.0
  %1078 = vmatprep.subr.mxu0 0.0
  %1079 = vmatpush1.msra.mxu0 0.0
  %1080 = vmatprep.subr.mxu0 0.0
  %1081 = vmatpush1.msra.mxu0 0.0
  %1082 = vmatprep.subr.mxu0 0.0
  %1083 = vmatpush1.msra.mxu0 0.0
  %1084 = vmatprep.subr.mxu0 0.0
  %1085 = vmatpush1.msra.mxu0 0.0
  %1086 = vmatprep.subr.mxu0 0.0
  %1087 = vmatpush1.msra.mxu0 0.0
  %1088 = vmatprep.subr.mxu0 0.0
  %1089 = vmatpush1.msra.mxu0 0.0
  %1090 = vmatprep.subr.mxu0 0.0
  %1091 = vmatpush1.msra.mxu0 0.0
  %1092 = vmatprep.subr.mxu0 0.0
  %1093 = vmatpush1.msra.mxu0 0.0
  %1094 = vmatprep.mubr.f32.mxu0 0.0
  %1095 = vmatmul.mubr.f32.gmra.mrb[0].mxu0 %v1025
  %v1096 = vpop.f32.mrb[0].mxu0
  %v1097 = vadd.f32 0.0, %v1096
  %v1098 = vpop.f32.mrb[0].mxu0
  %1099 = vmatprep.mubr.f32.mxu0 0.0
  %1100 = vmatmul.mubr.f32.gmra.mrb[0].mxu0 %v1028
  %v1101 = vpop.f32.mrb[0].mxu0
  %v1102 = vadd.f32 0.0, %v1101
  %v1103 = vpop.f32.mrb[0].mxu0
  %1104 = vdwg.mxu0
  %v1105 = vadd.f32 %v886, %v1097
  %v1106 = vadd.f32 %v887, %v1102
  %s1107 = scalar_lea.vmem %s6, 64
  %v1108 = vld [vmem:[%s1107] sm:$0xff]
  %v1109 = vld [vmem:[%s1107 + $0x8] sm:$0xff]
  %v1110 = vld [vmem:[%s1107 + $0x10] sm:$0xff]
  %v1111 = vld [vmem:[%s1107 + $0x18] sm:$0xff]
  %v1112 = vld [vmem:[%s1107 + $0x20] sm:$0xff]
  %v1113 = vld [vmem:[%s1107 + $0x28] sm:$0xff]
  %v1114 = vld [vmem:[%s1107 + $0x30] sm:$0xff]
  %v1115 = vld [vmem:[%s1107 + $0x38] sm:$0xff]
  %s1116 = scalar_lea.vmem %s7, 96
  %v1117 = vld [vmem:[%s1116] sm:$0xff]
  %v1118 = vld [vmem:[%s1116 + $0x8] sm:$0xff]
  %v1119 = vld [vmem:[%s1116 + $0x10] sm:$0xff]
  %v1120 = vld [vmem:[%s1116 + $0x18] sm:$0xff]
  %v1121 = vld [vmem:[%s1116 + $0x20] sm:$0xff]
  %v1122 = vld [vmem:[%s1116 + $0x28] sm:$0xff]
  %v1123 = vld [vmem:[%s1116 + $0x30] sm:$0xff]
  %v1124 = vld [vmem:[%s1116 + $0x38] sm:$0xff]
  %v1125 = vld [vmem:[%s1116 + $0x40] sm:$0xff]
  %v1126 = vld [vmem:[%s1116 + $0x48] sm:$0xff]
  %v1127 = vld [vmem:[%s1116 + $0x50] sm:$0xff]
  %v1128 = vld [vmem:[%s1116 + $0x58] sm:$0xff]
  %s1129 = scalar_lea.vmem %s5, 2
  %v1130 = vld [vmem:[%s1129] sm:$0x1]
  %v1131 = vmul.f32 %v1105, %v1105
  %v1132 = vmul.f32 %v1106, %v1106
  %v1133 = vsel %vm167, %v1131, 0.0
  %1134 = vadd.xlane.f32.xlu0 %v1133
  %v1135 = vpop.xlane.xlu0 %1134
  %v1136 = vsel %vm167, %v1132, 0.0
  %1137 = vadd.xlane.f32.xlu0 %v1136
  %v1138 = vpop.xlane.xlu0 %1137
  %v1139 = vmul.f32 %v1135, %v174
  %v1140 = vmul.f32 %v1138, %v174
  %v1141 = vadd.f32 %v1139, 1e-06
  %v1142 = vadd.f32 %v1140, 1e-06
  %v1143 = vrsqrt.pop %v1141
  %v1144 = vrsqrt.pop %v1142
  %v1145 = vmul.f32 %v1105, %v1143
  %v1146 = vmul.f32 %v1106, %v1144
  %v1147 = vadd.f32 %v1130, 1.0
  %v1149 = vlaneseq
  %v1150 = vshrl.u32 %v1149, 7
  %v1151 = vsub.s32 0, %v1150
  %v1152 = vrot.slane %v1147, %v1151
  %v1154 = vmul.f32 %v1145, %v1152
  %v1155 = vmul.f32 %v1146, %v1152
  %v1157 = vsel %vm167, %v1154, 0
  %v1160 = vsel %vm167, %v1155, 0
  %1162 = vmatprep.subr.mxu0 0.0
  %1163 = vmatpush1.msra.mxu0 %v1109
  %1164 = vmatprep.subr.mxu0 0.0
  %1165 = vmatpush1.msra.mxu0 %v1111
  %1166 = vmatprep.subr.mxu0 0.0
  %1167 = vmatpush1.msra.mxu0 %v1113
  %1168 = vmatprep.subr.mxu0 0.0
  %1169 = vmatpush1.msra.mxu0 %v1115
  %1170 = vmatprep.subr.mxu0 0.0
  %1171 = vmatpush1.msra.mxu0 0.0
  %1172 = vmatprep.subr.mxu0 0.0
  %1173 = vmatpush1.msra.mxu0 0.0
  %1174 = vmatprep.subr.mxu0 0.0
  %1175 = vmatpush1.msra.mxu0 0.0
  %1176 = vmatprep.subr.mxu0 0.0
  %1177 = vmatpush1.msra.mxu0 0.0
  %1178 = vmatprep.subr.mxu0 0.0
  %1179 = vmatpush1.msra.mxu0 0.0
  %1180 = vmatprep.subr.mxu0 0.0
  %1181 = vmatpush1.msra.mxu0 0.0
  %1182 = vmatprep.subr.mxu0 0.0
  %1183 = vmatpush1.msra.mxu0 0.0
  %1184 = vmatprep.subr.mxu0 0.0
  %1185 = vmatpush1.msra.mxu0 0.0
  %1186 = vmatprep.subr.mxu0 0.0
  %1187 = vmatpush1.msra.mxu0 0.0
  %1188 = vmatprep.subr.mxu0 0.0
  %1189 = vmatpush1.msra.mxu0 0.0
  %1190 = vmatprep.subr.mxu0 0.0
  %1191 = vmatpush1.msra.mxu0 0.0
  %1192 = vmatprep.subr.mxu0 0.0
  %1193 = vmatpush1.msra.mxu0 0.0
  %1194 = vmatprep.subr.mxu0 0.0
  %1195 = vmatpush1.msra.mxu0 0.0
  %1196 = vmatprep.subr.mxu0 0.0
  %1197 = vmatpush1.msra.mxu0 0.0
  %1198 = vmatprep.subr.mxu0 0.0
  %1199 = vmatpush1.msra.mxu0 0.0
  %1200 = vmatprep.subr.mxu0 0.0
  %1201 = vmatpush1.msra.mxu0 0.0
  %1202 = vmatprep.subr.mxu0 0.0
  %1203 = vmatpush1.msra.mxu0 0.0
  %1204 = vmatprep.subr.mxu0 0.0
  %1205 = vmatpush1.msra.mxu0 0.0
  %1206 = vmatprep.subr.mxu0 0.0
  %1207 = vmatpush1.msra.mxu0 0.0
  %1208 = vmatprep.subr.mxu0 0.0
  %1209 = vmatpush1.msra.mxu0 0.0
  %1210 = vmatprep.subr.mxu0 0.0
  %1211 = vmatpush1.msra.mxu0 0.0
  %1212 = vmatprep.subr.mxu0 0.0
  %1213 = vmatpush1.msra.mxu0 0.0
  %1214 = vmatprep.subr.mxu0 0.0
  %1215 = vmatpush1.msra.mxu0 0.0
  %1216 = vmatprep.subr.mxu0 0.0
  %1217 = vmatpush1.msra.mxu0 0.0
  %1218 = vmatprep.subr.mxu0 0.0
  %1219 = vmatpush1.msra.mxu0 0.0
  %1220 = vmatprep.subr.mxu0 0.0
  %1221 = vmatpush1.msra.mxu0 0.0
  %1222 = vmatprep.subr.mxu0 0.0
  %1223 = vmatpush1.msra.mxu0 0.0
  %1224 = vmatprep.subr.mxu0 0.0
  %1225 = vmatpush1.msra.mxu0 0.0
  %1226 = vmatprep.mubr.f32.mxu0 0.0
  %1227 = vmatmul.mubr.f32.gmra.mrb[0].mxu0 %v1157
  %v1228 = vpop.f32.mrb[0].mxu0
  %v1229 = vadd.f32 0.0, %v1228
  %v1230 = vpop.f32.mrb[0].mxu0
  %1231 = vmatprep.mubr.f32.mxu0 0.0
  %1232 = vmatmul.mubr.f32.gmra.mrb[0].mxu0 %v1160
  %v1233 = vpop.f32.mrb[0].mxu0
  %v1234 = vadd.f32 0.0, %v1233
  %v1235 = vpop.f32.mrb[0].mxu0
  %1236 = vdwg.mxu0
  %1239 = vrot.lane.b32.xlu0 %v1229, 120
  %v1240 = vpop.permute.xlu0 %1239
  %1241 = vrot.lane.b32.xlu0 %v1234, 120
  %v1242 = vpop.permute.xlu0 %1241
  %1245 = vrot.lane.b32.xlu0 %v1229, 8
  %v1246 = vpop.permute.xlu0 %1245
  %1247 = vrot.lane.b32.xlu0 %v1234, 8
  %v1248 = vpop.permute.xlu0 %1247
  %v1251 = vsel %vm287, %v1240, %v1246
  %v1252 = vsel %vm287, %v1242, %v1248
  %v1253 = vmul.f32 %v1229, %v29
  %v1254 = vmul.f32 %v1234, %v30
  %v1255 = vmul.f32 %v1251, %v32
  %v1256 = vmul.f32 %v1252, %v33
  %v1257 = vadd.f32 %v1253, %v1255
  %v1258 = vadd.f32 %v1254, %v1256
  %1259 = vrot.lane.b32.xlu0 %v1229, 88
  %v1260 = vpop.permute.xlu0 %1259
  %1261 = vrot.lane.b32.xlu0 %v1234, 88
  %v1262 = vpop.permute.xlu0 %1261
  %1265 = vrot.lane.b32.xlu0 %v1229, 104
  %v1266 = vpop.permute.xlu0 %1265
  %1267 = vrot.lane.b32.xlu0 %v1234, 104
  %v1268 = vpop.permute.xlu0 %1267
  %v1271 = vsel %vm287, %v1260, %v1266
  %v1272 = vsel %vm287, %v1262, %v1268
  %v1273 = vmul.f32 %v1229, %v313
  %v1274 = vmul.f32 %v1234, %v315
  %v1275 = vmul.f32 %v1271, %v32
  %v1276 = vmul.f32 %v1272, %v33
  %1279 = vrot.lane.b32.xlu0 %v1275, 32
  %v1280 = vpop.permute.xlu0 %1279
  %1281 = vrot.lane.b32.xlu0 %v1276, 32
  %v1282 = vpop.permute.xlu0 %1281
  %v1285 = vadd.f32 %v1273, %v1280
  %v1286 = vadd.f32 %v1274, %v1282
  %1289 = vrot.lane.b32.xlu0 %v1285, 96
  %v1290 = vpop.permute.xlu0 %1289
  %1291 = vrot.lane.b32.xlu0 %v1286, 96
  %v1292 = vpop.permute.xlu0 %1291
  %v1294 = vsel %vm338, %v1257, 0
  %v1297 = vsel %vm338, %v1258, 0
  %v1299 = vsel %vm338, %v1290, 0
  %v1301 = vsel %vm338, %v1292, 0
  %1303 = vmatprep.subr.mxu0 0.0
  %1304 = vmatpush1.xpose.msra.mxu0 %v1299
  %1305 = vmatprep.subr.mxu0 0.0
  %1306 = vmatpush1.xpose.msra.mxu0 %v1301
  %1307 = vmatprep.subr.mxu0 0.0
  %1308 = vmatpush1.xpose.msra.mxu0 0.0
  %1309 = vmatprep.subr.mxu0 0.0
  %1310 = vmatpush1.xpose.msra.mxu0 0.0
  %1311 = vmatprep.subr.mxu0 0.0
  %1312 = vmatpush1.xpose.msra.mxu0 0.0
  %1313 = vmatprep.subr.mxu0 0.0
  %1314 = vmatpush1.xpose.msra.mxu0 0.0
  %1315 = vmatprep.subr.mxu0 0.0
  %1316 = vmatpush1.xpose.msra.mxu0 0.0
  %1317 = vmatprep.subr.mxu0 0.0
  %1318 = vmatpush1.xpose.msra.mxu0 0.0
  %1319 = vmatprep.subr.mxu0 0.0
  %1320 = vmatpush1.xpose.msra.mxu0 0.0
  %1321 = vmatprep.subr.mxu0 0.0
  %1322 = vmatpush1.xpose.msra.mxu0 0.0
  %1323 = vmatprep.subr.mxu0 0.0
  %1324 = vmatpush1.xpose.msra.mxu0 0.0
  %1325 = vmatprep.subr.mxu0 0.0
  %1326 = vmatpush1.xpose.msra.mxu0 0.0
  %1327 = vmatprep.subr.mxu0 0.0
  %1328 = vmatpush1.xpose.msra.mxu0 0.0
  %1329 = vmatprep.subr.mxu0 0.0
  %1330 = vmatpush1.xpose.msra.mxu0 0.0
  %1331 = vmatprep.subr.mxu0 0.0
  %1332 = vmatpush1.xpose.msra.mxu0 0.0
  %1333 = vmatprep.subr.mxu0 0.0
  %1334 = vmatpush1.xpose.msra.mxu0 0.0
  %1335 = vmatprep.subr.mxu0 0.0
  %1336 = vmatpush1.xpose.msra.mxu0 0.0
  %1337 = vmatprep.subr.mxu0 0.0
  %1338 = vmatpush1.xpose.msra.mxu0 0.0
  %1339 = vmatprep.subr.mxu0 0.0
  %1340 = vmatpush1.xpose.msra.mxu0 0.0
  %1341 = vmatprep.subr.mxu0 0.0
  %1342 = vmatpush1.xpose.msra.mxu0 0.0
  %1343 = vmatprep.subr.mxu0 0.0
  %1344 = vmatpush1.xpose.msra.mxu0 0.0
  %1345 = vmatprep.subr.mxu0 0.0
  %1346 = vmatpush1.xpose.msra.mxu0 0.0
  %1347 = vmatprep.subr.mxu0 0.0
  %1348 = vmatpush1.xpose.msra.mxu0 0.0
  %1349 = vmatprep.subr.mxu0 0.0
  %1350 = vmatpush1.xpose.msra.mxu0 0.0
  %1351 = vmatprep.subr.mxu0 0.0
  %1352 = vmatpush1.xpose.msra.mxu0 0.0
  %1353 = vmatprep.subr.mxu0 0.0
  %1354 = vmatpush1.xpose.msra.mxu0 0.0
  %1355 = vmatprep.subr.mxu0 0.0
  %1356 = vmatpush1.xpose.msra.mxu0 0.0
  %1357 = vmatprep.subr.mxu0 0.0
  %1358 = vmatpush1.xpose.msra.mxu0 0.0
  %1359 = vmatprep.subr.mxu0 0.0
  %1360 = vmatpush1.xpose.msra.mxu0 0.0
  %1361 = vmatprep.subr.mxu0 0.0
  %1362 = vmatpush1.xpose.msra.mxu0 0.0
  %1363 = vmatprep.subr.mxu0 0.0
  %1364 = vmatpush1.xpose.msra.mxu0 0.0
  %1365 = vmatprep.subr.mxu0 0.0
  %1366 = vmatpush1.xpose.msra.mxu0 0.0
  %1367 = vmatprep.mubr.f32.mxu0 0.0
  %1368 = vmatmul.mubr.f32.gmra.mrb[0].mxu0 %v1294
  %v1369 = vpop.f32.mrb[0].mxu0
  %v1370 = vadd.f32 0.0, %v1369
  %v1371 = vpop.f32.mrb[0].mxu0
  %1372 = vmatprep.mubr.f32.mxu0 0.0
  %1373 = vmatmul.mubr.f32.gmra.mrb[0].mxu0 %v1297
  %v1374 = vpop.f32.mrb[0].mxu0
  %v1375 = vadd.f32 0.0, %v1374
  %v1376 = vpop.f32.mrb[0].mxu0
  %1377 = vdwg.mxu0
  %v1378 = vmul.f32 %v1370, 0.25
  %v1379 = vmul.f32 %v1375, 0.25
  %v1380 = vadd.f32 %v1378, %v34
  %v1381 = vadd.f32 %v1379, %v35
  %v1382 = vsel %vm338, %v1380, -inf
  %1383 = vmax.xlane.f32.xlu0 %v1382
  %v1384 = vpop.xlane.xlu0 %1383
  %v1385 = vsel %vm338, %v1381, -inf
  %1386 = vmax.xlane.f32.xlu0 %v1385
  %v1387 = vpop.xlane.xlu0 %1386
  %v1388 = vsub.f32 %v1380, %v1384
  %v1389 = vsub.f32 %v1381, %v1387
  %v1390 = vmul.f32 %v1388, 1.442695
  %v1391 = vpow.pop %v1390
  %v1392 = vmul.f32 %v1389, 1.442695
  %v1393 = vpow.pop %v1392
  %v1394 = vsel %vm338, %v1391, 0.0
  %1395 = vadd.xlane.f32.xlu0 %v1394
  %v1396 = vpop.xlane.xlu0 %1395
  %v1397 = vsel %vm338, %v1393, 0.0
  %1398 = vadd.xlane.f32.xlu0 %v1397
  %v1399 = vpop.xlane.xlu0 %1398
  %v1400 = vrcp.pop %v1396
  %v1401 = vrcp.pop %v1399
  %1402 = vrot.lane.b32.xlu0 %v1229, 64
  %v1403 = vpop.permute.xlu0 %1402
  %1404 = vrot.lane.b32.xlu0 %v1234, 64
  %v1405 = vpop.permute.xlu0 %1404
  %v1409 = vsel %vm338, %v1391, 0
  %v1412 = vsel %vm338, %v1393, 0
  %1414 = vmatprep.subr.mxu0 0.0
  %1415 = vmatpush1.msra.mxu0 %v1403
  %1416 = vmatprep.subr.mxu0 0.0
  %1417 = vmatpush1.msra.mxu0 %v1405
  %1418 = vmatprep.subr.mxu0 0.0
  %1419 = vmatpush1.msra.mxu0 0.0
  %1420 = vmatprep.subr.mxu0 0.0
  %1421 = vmatpush1.msra.mxu0 0.0
  %1422 = vmatprep.subr.mxu0 0.0
  %1423 = vmatpush1.msra.mxu0 0.0
  %1424 = vmatprep.subr.mxu0 0.0
  %1425 = vmatpush1.msra.mxu0 0.0
  %1426 = vmatprep.subr.mxu0 0.0
  %1427 = vmatpush1.msra.mxu0 0.0
  %1428 = vmatprep.subr.mxu0 0.0
  %1429 = vmatpush1.msra.mxu0 0.0
  %1430 = vmatprep.subr.mxu0 0.0
  %1431 = vmatpush1.msra.mxu0 0.0
  %1432 = vmatprep.subr.mxu0 0.0
  %1433 = vmatpush1.msra.mxu0 0.0
  %1434 = vmatprep.subr.mxu0 0.0
  %1435 = vmatpush1.msra.mxu0 0.0
  %1436 = vmatprep.subr.mxu0 0.0
  %1437 = vmatpush1.msra.mxu0 0.0
  %1438 = vmatprep.subr.mxu0 0.0
  %1439 = vmatpush1.msra.mxu0 0.0
  %1440 = vmatprep.subr.mxu0 0.0
  %1441 = vmatpush1.msra.mxu0 0.0
  %1442 = vmatprep.subr.mxu0 0.0
  %1443 = vmatpush1.msra.mxu0 0.0
  %1444 = vmatprep.subr.mxu0 0.0
  %1445 = vmatpush1.msra.mxu0 0.0
  %1446 = vmatprep.subr.mxu0 0.0
  %1447 = vmatpush1.msra.mxu0 0.0
  %1448 = vmatprep.subr.mxu0 0.0
  %1449 = vmatpush1.msra.mxu0 0.0
  %1450 = vmatprep.subr.mxu0 0.0
  %1451 = vmatpush1.msra.mxu0 0.0
  %1452 = vmatprep.subr.mxu0 0.0
  %1453 = vmatpush1.msra.mxu0 0.0
  %1454 = vmatprep.subr.mxu0 0.0
  %1455 = vmatpush1.msra.mxu0 0.0
  %1456 = vmatprep.subr.mxu0 0.0
  %1457 = vmatpush1.msra.mxu0 0.0
  %1458 = vmatprep.subr.mxu0 0.0
  %1459 = vmatpush1.msra.mxu0 0.0
  %1460 = vmatprep.subr.mxu0 0.0
  %1461 = vmatpush1.msra.mxu0 0.0
  %1462 = vmatprep.subr.mxu0 0.0
  %1463 = vmatpush1.msra.mxu0 0.0
  %1464 = vmatprep.subr.mxu0 0.0
  %1465 = vmatpush1.msra.mxu0 0.0
  %1466 = vmatprep.subr.mxu0 0.0
  %1467 = vmatpush1.msra.mxu0 0.0
  %1468 = vmatprep.subr.mxu0 0.0
  %1469 = vmatpush1.msra.mxu0 0.0
  %1470 = vmatprep.subr.mxu0 0.0
  %1471 = vmatpush1.msra.mxu0 0.0
  %1472 = vmatprep.subr.mxu0 0.0
  %1473 = vmatpush1.msra.mxu0 0.0
  %1474 = vmatprep.subr.mxu0 0.0
  %1475 = vmatpush1.msra.mxu0 0.0
  %1476 = vmatprep.subr.mxu0 0.0
  %1477 = vmatpush1.msra.mxu0 0.0
  %1478 = vmatprep.mubr.f32.mxu0 0.0
  %1479 = vmatmul.mubr.f32.gmra.mrb[0].mxu0 %v1409
  %v1480 = vpop.f32.mrb[0].mxu0
  %v1481 = vadd.f32 0.0, %v1480
  %v1482 = vpop.f32.mrb[0].mxu0
  %1483 = vmatprep.mubr.f32.mxu0 0.0
  %1484 = vmatmul.mubr.f32.gmra.mrb[0].mxu0 %v1412
  %v1485 = vpop.f32.mrb[0].mxu0
  %v1486 = vadd.f32 0.0, %v1485
  %v1487 = vpop.f32.mrb[0].mxu0
  %1488 = vdwg.mxu0
  %v1489 = vmul.f32 %v1481, %v1400
  %v1490 = vmul.f32 %v1486, %v1401
  %v1491 = vsel %vm287, %v1266, %v1240
  %v1492 = vsel %vm287, %v1268, %v1242
  %v1493 = vmul.f32 %v1229, %v540
  %v1494 = vmul.f32 %v1234, %v542
  %v1495 = vmul.f32 %v1491, %v32
  %v1496 = vmul.f32 %v1492, %v33
  %1499 = vrot.lane.b32.xlu0 %v1495, 16
  %v1500 = vpop.permute.xlu0 %1499
  %1501 = vrot.lane.b32.xlu0 %v1496, 16
  %v1502 = vpop.permute.xlu0 %1501
  %v1505 = vadd.f32 %v1493, %v1500
  %v1506 = vadd.f32 %v1494, %v1502
  %1507 = vrot.lane.b32.xlu0 %v1229, 72
  %v1508 = vpop.permute.xlu0 %1507
  %1509 = vrot.lane.b32.xlu0 %v1234, 72
  %v1510 = vpop.permute.xlu0 %1509
  %v1513 = vsel %vm287, %v1508, %v1260
  %v1514 = vsel %vm287, %v1510, %v1262
  %v1515 = vmul.f32 %v1229, %v568
  %v1516 = vmul.f32 %v1234, %v570
  %v1517 = vmul.f32 %v1513, %v32
  %v1518 = vmul.f32 %v1514, %v33
  %1521 = vrot.lane.b32.xlu0 %v1517, 48
  %v1522 = vpop.permute.xlu0 %1521
  %1523 = vrot.lane.b32.xlu0 %v1518, 48
  %v1524 = vpop.permute.xlu0 %1523
  %v1527 = vadd.f32 %v1515, %v1522
  %v1528 = vadd.f32 %v1516, %v1524
  %1531 = vrot.lane.b32.xlu0 %v1505, 112
  %v1532 = vpop.permute.xlu0 %1531
  %1533 = vrot.lane.b32.xlu0 %v1506, 112
  %v1534 = vpop.permute.xlu0 %1533
  %1537 = vrot.lane.b32.xlu0 %v1527, 80
  %v1538 = vpop.permute.xlu0 %1537
  %1539 = vrot.lane.b32.xlu0 %v1528, 80
  %v1540 = vpop.permute.xlu0 %1539
  %v1541 = vsel %vm338, %v1532, 0
  %v1543 = vsel %vm338, %v1534, 0
  %v1545 = vsel %vm338, %v1538, 0
  %v1547 = vsel %vm338, %v1540, 0
  %1549 = vmatprep.subr.mxu0 0.0
  %1550 = vmatpush1.xpose.msra.mxu0 %v1545
  %1551 = vmatprep.subr.mxu0 0.0
  %1552 = vmatpush1.xpose.msra.mxu0 %v1547
  %1553 = vmatprep.subr.mxu0 0.0
  %1554 = vmatpush1.xpose.msra.mxu0 0.0
  %1555 = vmatprep.subr.mxu0 0.0
  %1556 = vmatpush1.xpose.msra.mxu0 0.0
  %1557 = vmatprep.subr.mxu0 0.0
  %1558 = vmatpush1.xpose.msra.mxu0 0.0
  %1559 = vmatprep.subr.mxu0 0.0
  %1560 = vmatpush1.xpose.msra.mxu0 0.0
  %1561 = vmatprep.subr.mxu0 0.0
  %1562 = vmatpush1.xpose.msra.mxu0 0.0
  %1563 = vmatprep.subr.mxu0 0.0
  %1564 = vmatpush1.xpose.msra.mxu0 0.0
  %1565 = vmatprep.subr.mxu0 0.0
  %1566 = vmatpush1.xpose.msra.mxu0 0.0
  %1567 = vmatprep.subr.mxu0 0.0
  %1568 = vmatpush1.xpose.msra.mxu0 0.0
  %1569 = vmatprep.subr.mxu0 0.0
  %1570 = vmatpush1.xpose.msra.mxu0 0.0
  %1571 = vmatprep.subr.mxu0 0.0
  %1572 = vmatpush1.xpose.msra.mxu0 0.0
  %1573 = vmatprep.subr.mxu0 0.0
  %1574 = vmatpush1.xpose.msra.mxu0 0.0
  %1575 = vmatprep.subr.mxu0 0.0
  %1576 = vmatpush1.xpose.msra.mxu0 0.0
  %1577 = vmatprep.subr.mxu0 0.0
  %1578 = vmatpush1.xpose.msra.mxu0 0.0
  %1579 = vmatprep.subr.mxu0 0.0
  %1580 = vmatpush1.xpose.msra.mxu0 0.0
  %1581 = vmatprep.subr.mxu0 0.0
  %1582 = vmatpush1.xpose.msra.mxu0 0.0
  %1583 = vmatprep.subr.mxu0 0.0
  %1584 = vmatpush1.xpose.msra.mxu0 0.0
  %1585 = vmatprep.subr.mxu0 0.0
  %1586 = vmatpush1.xpose.msra.mxu0 0.0
  %1587 = vmatprep.subr.mxu0 0.0
  %1588 = vmatpush1.xpose.msra.mxu0 0.0
  %1589 = vmatprep.subr.mxu0 0.0
  %1590 = vmatpush1.xpose.msra.mxu0 0.0
  %1591 = vmatprep.subr.mxu0 0.0
  %1592 = vmatpush1.xpose.msra.mxu0 0.0
  %1593 = vmatprep.subr.mxu0 0.0
  %1594 = vmatpush1.xpose.msra.mxu0 0.0
  %1595 = vmatprep.subr.mxu0 0.0
  %1596 = vmatpush1.xpose.msra.mxu0 0.0
  %1597 = vmatprep.subr.mxu0 0.0
  %1598 = vmatpush1.xpose.msra.mxu0 0.0
  %1599 = vmatprep.subr.mxu0 0.0
  %1600 = vmatpush1.xpose.msra.mxu0 0.0
  %1601 = vmatprep.subr.mxu0 0.0
  %1602 = vmatpush1.xpose.msra.mxu0 0.0
  %1603 = vmatprep.subr.mxu0 0.0
  %1604 = vmatpush1.xpose.msra.mxu0 0.0
  %1605 = vmatprep.subr.mxu0 0.0
  %1606 = vmatpush1.xpose.msra.mxu0 0.0
  %1607 = vmatprep.subr.mxu0 0.0
  %1608 = vmatpush1.xpose.msra.mxu0 0.0
  %1609 = vmatprep.subr.mxu0 0.0
  %1610 = vmatpush1.xpose.msra.mxu0 0.0
  %1611 = vmatprep.subr.mxu0 0.0
  %1612 = vmatpush1.xpose.msra.mxu0 0.0
  %1613 = vmatprep.mubr.f32.mxu0 0.0
  %1614 = vmatmul.mubr.f32.gmra.mrb[0].mxu0 %v1541
  %v1615 = vpop.f32.mrb[0].mxu0
  %v1616 = vadd.f32 0.0, %v1615
  %v1617 = vpop.f32.mrb[0].mxu0
  %1618 = vmatprep.mubr.f32.mxu0 0.0
  %1619 = vmatmul.mubr.f32.gmra.mrb[0].mxu0 %v1543
  %v1620 = vpop.f32.mrb[0].mxu0
  %v1621 = vadd.f32 0.0, %v1620
  %v1622 = vpop.f32.mrb[0].mxu0
  %1623 = vdwg.mxu0
  %v1624 = vmul.f32 %v1616, 0.25
  %v1625 = vmul.f32 %v1621, 0.25
  %v1626 = vadd.f32 %v1624, %v34
  %v1627 = vadd.f32 %v1625, %v35
  %v1628 = vsel %vm338, %v1626, -inf
  %1629 = vmax.xlane.f32.xlu0 %v1628
  %v1630 = vpop.xlane.xlu0 %1629
  %v1631 = vsel %vm338, %v1627, -inf
  %1632 = vmax.xlane.f32.xlu0 %v1631
  %v1633 = vpop.xlane.xlu0 %1632
  %v1634 = vsub.f32 %v1626, %v1630
  %v1635 = vsub.f32 %v1627, %v1633
  %v1636 = vmul.f32 %v1634, 1.442695
  %v1637 = vpow.pop %v1636
  %v1638 = vmul.f32 %v1635, 1.442695
  %v1639 = vpow.pop %v1638
  %v1640 = vsel %vm338, %v1637, 0.0
  %1641 = vadd.xlane.f32.xlu0 %v1640
  %v1642 = vpop.xlane.xlu0 %1641
  %v1643 = vsel %vm338, %v1639, 0.0
  %1644 = vadd.xlane.f32.xlu0 %v1643
  %v1645 = vpop.xlane.xlu0 %1644
  %v1646 = vrcp.pop %v1642
  %v1647 = vrcp.pop %v1645
  %1648 = vrot.lane.b32.xlu0 %v1229, 48
  %v1649 = vpop.permute.xlu0 %1648
  %1650 = vrot.lane.b32.xlu0 %v1234, 48
  %v1651 = vpop.permute.xlu0 %1650
  %v1655 = vsel %vm338, %v1637, 0
  %v1658 = vsel %vm338, %v1639, 0
  %1660 = vmatprep.subr.mxu0 0.0
  %1661 = vmatpush1.msra.mxu0 %v1649
  %1662 = vmatprep.subr.mxu0 0.0
  %1663 = vmatpush1.msra.mxu0 %v1651
  %1664 = vmatprep.subr.mxu0 0.0
  %1665 = vmatpush1.msra.mxu0 0.0
  %1666 = vmatprep.subr.mxu0 0.0
  %1667 = vmatpush1.msra.mxu0 0.0
  %1668 = vmatprep.subr.mxu0 0.0
  %1669 = vmatpush1.msra.mxu0 0.0
  %1670 = vmatprep.subr.mxu0 0.0
  %1671 = vmatpush1.msra.mxu0 0.0
  %1672 = vmatprep.subr.mxu0 0.0
  %1673 = vmatpush1.msra.mxu0 0.0
  %1674 = vmatprep.subr.mxu0 0.0
  %1675 = vmatpush1.msra.mxu0 0.0
  %1676 = vmatprep.subr.mxu0 0.0
  %1677 = vmatpush1.msra.mxu0 0.0
  %1678 = vmatprep.subr.mxu0 0.0
  %1679 = vmatpush1.msra.mxu0 0.0
  %1680 = vmatprep.subr.mxu0 0.0
  %1681 = vmatpush1.msra.mxu0 0.0
  %1682 = vmatprep.subr.mxu0 0.0
  %1683 = vmatpush1.msra.mxu0 0.0
  %1684 = vmatprep.subr.mxu0 0.0
  %1685 = vmatpush1.msra.mxu0 0.0
  %1686 = vmatprep.subr.mxu0 0.0
  %1687 = vmatpush1.msra.mxu0 0.0
  %1688 = vmatprep.subr.mxu0 0.0
  %1689 = vmatpush1.msra.mxu0 0.0
  %1690 = vmatprep.subr.mxu0 0.0
  %1691 = vmatpush1.msra.mxu0 0.0
  %1692 = vmatprep.subr.mxu0 0.0
  %1693 = vmatpush1.msra.mxu0 0.0
  %1694 = vmatprep.subr.mxu0 0.0
  %1695 = vmatpush1.msra.mxu0 0.0
  %1696 = vmatprep.subr.mxu0 0.0
  %1697 = vmatpush1.msra.mxu0 0.0
  %1698 = vmatprep.subr.mxu0 0.0
  %1699 = vmatpush1.msra.mxu0 0.0
  %1700 = vmatprep.subr.mxu0 0.0
  %1701 = vmatpush1.msra.mxu0 0.0
  %1702 = vmatprep.subr.mxu0 0.0
  %1703 = vmatpush1.msra.mxu0 0.0
  %1704 = vmatprep.subr.mxu0 0.0
  %1705 = vmatpush1.msra.mxu0 0.0
  %1706 = vmatprep.subr.mxu0 0.0
  %1707 = vmatpush1.msra.mxu0 0.0
  %1708 = vmatprep.subr.mxu0 0.0
  %1709 = vmatpush1.msra.mxu0 0.0
  %1710 = vmatprep.subr.mxu0 0.0
  %1711 = vmatpush1.msra.mxu0 0.0
  %1712 = vmatprep.subr.mxu0 0.0
  %1713 = vmatpush1.msra.mxu0 0.0
  %1714 = vmatprep.subr.mxu0 0.0
  %1715 = vmatpush1.msra.mxu0 0.0
  %1716 = vmatprep.subr.mxu0 0.0
  %1717 = vmatpush1.msra.mxu0 0.0
  %1718 = vmatprep.subr.mxu0 0.0
  %1719 = vmatpush1.msra.mxu0 0.0
  %1720 = vmatprep.subr.mxu0 0.0
  %1721 = vmatpush1.msra.mxu0 0.0
  %1722 = vmatprep.subr.mxu0 0.0
  %1723 = vmatpush1.msra.mxu0 0.0
  %1724 = vmatprep.mubr.f32.mxu0 0.0
  %1725 = vmatmul.mubr.f32.gmra.mrb[0].mxu0 %v1655
  %v1726 = vpop.f32.mrb[0].mxu0
  %v1727 = vadd.f32 0.0, %v1726
  %v1728 = vpop.f32.mrb[0].mxu0
  %1729 = vmatprep.mubr.f32.mxu0 0.0
  %1730 = vmatmul.mubr.f32.gmra.mrb[0].mxu0 %v1658
  %v1731 = vpop.f32.mrb[0].mxu0
  %v1732 = vadd.f32 0.0, %v1731
  %v1733 = vpop.f32.mrb[0].mxu0
  %1734 = vdwg.mxu0
  %v1735 = vmul.f32 %v1727, %v1646
  %v1736 = vmul.f32 %v1732, %v1647
  %1739 = vrot.lane.b32.xlu0 %v1735, 16
  %v1740 = vpop.permute.xlu0 %1739
  %1741 = vrot.lane.b32.xlu0 %v1736, 16
  %v1742 = vpop.permute.xlu0 %1741
  %v1745 = vsel %vm338, %v1489, %v1740
  %v1746 = vsel %vm338, %v1490, %v1742
  %v1748 = vsel %vm167, %v1745, 0
  %v1751 = vsel %vm167, %v1746, 0
  %1753 = vmatprep.subr.mxu0 0.0
  %1754 = vmatpush1.msra.mxu0 %v1117
  %1755 = vmatprep.subr.mxu0 0.0
  %1756 = vmatpush1.msra.mxu0 %v1118
  %1757 = vmatprep.subr.mxu0 0.0
  %1758 = vmatpush1.msra.mxu0 %v1119
  %1759 = vmatprep.subr.mxu0 0.0
  %1760 = vmatpush1.msra.mxu0 %v1120
  %1761 = vmatprep.subr.mxu0 0.0
  %1762 = vmatpush1.msra.mxu0 0.0
  %1763 = vmatprep.subr.mxu0 0.0
  %1764 = vmatpush1.msra.mxu0 0.0
  %1765 = vmatprep.subr.mxu0 0.0
  %1766 = vmatpush1.msra.mxu0 0.0
  %1767 = vmatprep.subr.mxu0 0.0
  %1768 = vmatpush1.msra.mxu0 0.0
  %1769 = vmatprep.subr.mxu0 0.0
  %1770 = vmatpush1.msra.mxu0 0.0
  %1771 = vmatprep.subr.mxu0 0.0
  %1772 = vmatpush1.msra.mxu0 0.0
  %1773 = vmatprep.subr.mxu0 0.0
  %1774 = vmatpush1.msra.mxu0 0.0
  %1775 = vmatprep.subr.mxu0 0.0
  %1776 = vmatpush1.msra.mxu0 0.0
  %1777 = vmatprep.subr.mxu0 0.0
  %1778 = vmatpush1.msra.mxu0 0.0
  %1779 = vmatprep.subr.mxu0 0.0
  %1780 = vmatpush1.msra.mxu0 0.0
  %1781 = vmatprep.subr.mxu0 0.0
  %1782 = vmatpush1.msra.mxu0 0.0
  %1783 = vmatprep.subr.mxu0 0.0
  %1784 = vmatpush1.msra.mxu0 0.0
  %1785 = vmatprep.subr.mxu0 0.0
  %1786 = vmatpush1.msra.mxu0 0.0
  %1787 = vmatprep.subr.mxu0 0.0
  %1788 = vmatpush1.msra.mxu0 0.0
  %1789 = vmatprep.subr.mxu0 0.0
  %1790 = vmatpush1.msra.mxu0 0.0
  %1791 = vmatprep.subr.mxu0 0.0
  %1792 = vmatpush1.msra.mxu0 0.0
  %1793 = vmatprep.subr.mxu0 0.0
  %1794 = vmatpush1.msra.mxu0 0.0
  %1795 = vmatprep.subr.mxu0 0.0
  %1796 = vmatpush1.msra.mxu0 0.0
  %1797 = vmatprep.subr.mxu0 0.0
  %1798 = vmatpush1.msra.mxu0 0.0
  %1799 = vmatprep.subr.mxu0 0.0
  %1800 = vmatpush1.msra.mxu0 0.0
  %1801 = vmatprep.subr.mxu0 0.0
  %1802 = vmatpush1.msra.mxu0 0.0
  %1803 = vmatprep.subr.mxu0 0.0
  %1804 = vmatpush1.msra.mxu0 0.0
  %1805 = vmatprep.subr.mxu0 0.0
  %1806 = vmatpush1.msra.mxu0 0.0
  %1807 = vmatprep.subr.mxu0 0.0
  %1808 = vmatpush1.msra.mxu0 0.0
  %1809 = vmatprep.subr.mxu0 0.0
  %1810 = vmatpush1.msra.mxu0 0.0
  %1811 = vmatprep.subr.mxu0 0.0
  %1812 = vmatpush1.msra.mxu0 0.0
  %1813 = vmatprep.subr.mxu0 0.0
  %1814 = vmatpush1.msra.mxu0 0.0
  %1815 = vmatprep.subr.mxu0 0.0
  %1816 = vmatpush1.msra.mxu0 0.0
  %1817 = vmatprep.mubr.f32.mxu0 0.0
  %1818 = vmatmul.mubr.f32.gmra.mrb[0].mxu0 %v1748
  %v1819 = vpop.f32.mrb[0].mxu0
  %v1820 = vadd.f32 0.0, %v1819
  %v1821 = vpop.f32.mrb[0].mxu0
  %1822 = vmatprep.mubr.f32.mxu0 0.0
  %1823 = vmatmul.mubr.f32.gmra.mrb[0].mxu0 %v1751
  %v1824 = vpop.f32.mrb[0].mxu0
  %v1825 = vadd.f32 0.0, %v1824
  %v1826 = vpop.f32.mrb[0].mxu0
  %1827 = vdwg.mxu0
  %v1828 = vadd.f32 %v1105, %v1820
  %v1829 = vadd.f32 %v1106, %v1825
  %s1830 = scalar_lea.vmem %s5, 3
  %v1831 = vld [vmem:[%s1830] sm:$0x1]
  %v1832 = vmul.f32 %v1828, %v1828
  %v1833 = vmul.f32 %v1829, %v1829
  %v1834 = vsel %vm167, %v1832, 0.0
  %1835 = vadd.xlane.f32.xlu0 %v1834
  %v1836 = vpop.xlane.xlu0 %1835
  %v1837 = vsel %vm167, %v1833, 0.0
  %1838 = vadd.xlane.f32.xlu0 %v1837
  %v1839 = vpop.xlane.xlu0 %1838
  %v1840 = vmul.f32 %v1836, %v174
  %v1841 = vmul.f32 %v1839, %v174
  %v1842 = vadd.f32 %v1840, 1e-06
  %v1843 = vadd.f32 %v1841, 1e-06
  %v1844 = vrsqrt.pop %v1842
  %v1845 = vrsqrt.pop %v1843
  %v1846 = vmul.f32 %v1828, %v1844
  %v1847 = vmul.f32 %v1829, %v1845
  %v1848 = vadd.f32 %v1831, 1.0
  %v1850 = vlaneseq
  %v1851 = vshrl.u32 %v1850, 7
  %v1852 = vsub.s32 0, %v1851
  %v1853 = vrot.slane %v1848, %v1852
  %v1855 = vmul.f32 %v1846, %v1853
  %v1856 = vmul.f32 %v1847, %v1853
  %v1858 = vsel %vm167, %v1855, 0
  %v1861 = vsel %vm167, %v1856, 0
  %1863 = vmatprep.subr.mxu0 0.0
  %1864 = vmatpush1.msra.mxu0 %v1108
  %1865 = vmatprep.subr.mxu0 0.0
  %1866 = vmatpush1.msra.mxu0 %v1110
  %1867 = vmatprep.subr.mxu0 0.0
  %1868 = vmatpush1.msra.mxu0 %v1112
  %1869 = vmatprep.subr.mxu0 0.0
  %1870 = vmatpush1.msra.mxu0 %v1114
  %1871 = vmatprep.subr.mxu0 0.0
  %1872 = vmatpush1.msra.mxu0 0.0
  %1873 = vmatprep.subr.mxu0 0.0
  %1874 = vmatpush1.msra.mxu0 0.0
  %1875 = vmatprep.subr.mxu0 0.0
  %1876 = vmatpush1.msra.mxu0 0.0
  %1877 = vmatprep.subr.mxu0 0.0
  %1878 = vmatpush1.msra.mxu0 0.0
  %1879 = vmatprep.subr.mxu0 0.0
  %1880 = vmatpush1.msra.mxu0 0.0
  %1881 = vmatprep.subr.mxu0 0.0
  %1882 = vmatpush1.msra.mxu0 0.0
  %1883 = vmatprep.subr.mxu0 0.0
  %1884 = vmatpush1.msra.mxu0 0.0
  %1885 = vmatprep.subr.mxu0 0.0
  %1886 = vmatpush1.msra.mxu0 0.0
  %1887 = vmatprep.subr.mxu0 0.0
  %1888 = vmatpush1.msra.mxu0 0.0
  %1889 = vmatprep.subr.mxu0 0.0
  %1890 = vmatpush1.msra.mxu0 0.0
  %1891 = vmatprep.subr.mxu0 0.0
  %1892 = vmatpush1.msra.mxu0 0.0
  %1893 = vmatprep.subr.mxu0 0.0
  %1894 = vmatpush1.msra.mxu0 0.0
  %1895 = vmatprep.subr.mxu0 0.0
  %1896 = vmatpush1.msra.mxu0 0.0
  %1897 = vmatprep.subr.mxu0 0.0
  %1898 = vmatpush1.msra.mxu0 0.0
  %1899 = vmatprep.subr.mxu0 0.0
  %1900 = vmatpush1.msra.mxu0 0.0
  %1901 = vmatprep.subr.mxu0 0.0
  %1902 = vmatpush1.msra.mxu0 0.0
  %1903 = vmatprep.subr.mxu0 0.0
  %1904 = vmatpush1.msra.mxu0 0.0
  %1905 = vmatprep.subr.mxu0 0.0
  %1906 = vmatpush1.msra.mxu0 0.0
  %1907 = vmatprep.subr.mxu0 0.0
  %1908 = vmatpush1.msra.mxu0 0.0
  %1909 = vmatprep.subr.mxu0 0.0
  %1910 = vmatpush1.msra.mxu0 0.0
  %1911 = vmatprep.subr.mxu0 0.0
  %1912 = vmatpush1.msra.mxu0 0.0
  %1913 = vmatprep.subr.mxu0 0.0
  %1914 = vmatpush1.msra.mxu0 0.0
  %1915 = vmatprep.subr.mxu0 0.0
  %1916 = vmatpush1.msra.mxu0 0.0
  %1917 = vmatprep.subr.mxu0 0.0
  %1918 = vmatpush1.msra.mxu0 0.0
  %1919 = vmatprep.subr.mxu0 0.0
  %1920 = vmatpush1.msra.mxu0 0.0
  %1921 = vmatprep.subr.mxu0 0.0
  %1922 = vmatpush1.msra.mxu0 0.0
  %1923 = vmatprep.subr.mxu0 0.0
  %1924 = vmatpush1.msra.mxu0 0.0
  %1925 = vmatprep.subr.mxu0 0.0
  %1926 = vmatpush1.msra.mxu0 0.0
  %1927 = vmatprep.mubr.f32.mxu0 0.0
  %1928 = vmatmul.mubr.f32.gmra.mrb[0].mxu0 %v1858
  %v1929 = vpop.f32.mrb[0].mxu0
  %v1930 = vadd.f32 0.0, %v1929
  %v1931 = vpop.f32.mrb[0].mxu0
  %1932 = vmatprep.mubr.f32.mxu0 0.0
  %1933 = vmatmul.mubr.f32.gmra.mrb[0].mxu0 %v1861
  %v1934 = vpop.f32.mrb[0].mxu0
  %v1935 = vadd.f32 0.0, %v1934
  %v1936 = vpop.f32.mrb[0].mxu0
  %1937 = vdwg.mxu0
  %v1938 = vmul.f32 %v1930, 0.5
  %v1939 = vmul.f32 %v1935, 0.5
  %v1940 = vmul.f32 %v1930, 0.044715
  %v1941 = vmul.f32 %v1935, 0.044715
  %v1942 = vmul.f32 %v1940, %v1930
  %v1943 = vmul.f32 %v1941, %v1935
  %v1944 = vmul.f32 %v1942, %v1930
  %v1945 = vmul.f32 %v1943, %v1935
  %v1946 = vadd.f32 %v1930, %v1944
  %v1947 = vadd.f32 %v1935, %v1945
  %v1948 = vmul.f32 %v1946, 0.7978846
  %v1949 = vmul.f32 %v1947, 0.7978846
  %v1950 = vtanh.pop %v1948
  %v1951 = vtanh.pop %v1949
  %v1952 = vadd.f32 %v1950, 1.0
  %v1953 = vadd.f32 %v1951, 1.0
  %v1954 = vmul.f32 %v1938, %v1952
  %v1955 = vmul.f32 %v1939, %v1953
  %1958 = vrot.lane.b32.xlu0 %v1930, 64
  %v1959 = vpop.permute.xlu0 %1958
  %1960 = vrot.lane.b32.xlu0 %v1935, 64
  %v1961 = vpop.permute.xlu0 %1960
  %v1964 = vmul.f32 %v1954, %v1959
  %v1965 = vmul.f32 %v1955, %v1961
  %v1967 = vsel %vm60, %v1964, 0
  %v1970 = vsel %vm60, %v1965, 0
  %1972 = vmatprep.subr.mxu0 0.0
  %1973 = vmatpush1.msra.mxu0 %v1121
  %1974 = vmatprep.subr.mxu0 0.0
  %1975 = vmatpush1.msra.mxu0 %v1122
  %1976 = vmatprep.subr.mxu0 0.0
  %1977 = vmatpush1.msra.mxu0 %v1123
  %1978 = vmatprep.subr.mxu0 0.0
  %1979 = vmatpush1.msra.mxu0 %v1124
  %1980 = vmatprep.subr.mxu0 0.0
  %1981 = vmatpush1.msra.mxu0 %v1125
  %1982 = vmatprep.subr.mxu0 0.0
  %1983 = vmatpush1.msra.mxu0 %v1126
  %1984 = vmatprep.subr.mxu0 0.0
  %1985 = vmatpush1.msra.mxu0 %v1127
  %1986 = vmatprep.subr.mxu0 0.0
  %1987 = vmatpush1.msra.mxu0 %v1128
  %1988 = vmatprep.subr.mxu0 0.0
  %1989 = vmatpush1.msra.mxu0 0.0
  %1990 = vmatprep.subr.mxu0 0.0
  %1991 = vmatpush1.msra.mxu0 0.0
  %1992 = vmatprep.subr.mxu0 0.0
  %1993 = vmatpush1.msra.mxu0 0.0
  %1994 = vmatprep.subr.mxu0 0.0
  %1995 = vmatpush1.msra.mxu0 0.0
  %1996 = vmatprep.subr.mxu0 0.0
  %1997 = vmatpush1.msra.mxu0 0.0
  %1998 = vmatprep.subr.mxu0 0.0
  %1999 = vmatpush1.msra.mxu0 0.0
  %2000 = vmatprep.subr.mxu0 0.0
  %2001 = vmatpush1.msra.mxu0 0.0
  %2002 = vmatprep.subr.mxu0 0.0
  %2003 = vmatpush1.msra.mxu0 0.0
  %2004 = vmatprep.subr.mxu0 0.0
  %2005 = vmatpush1.msra.mxu0 0.0
  %2006 = vmatprep.subr.mxu0 0.0
  %2007 = vmatpush1.msra.mxu0 0.0
  %2008 = vmatprep.subr.mxu0 0.0
  %2009 = vmatpush1.msra.mxu0 0.0
  %2010 = vmatprep.subr.mxu0 0.0
  %2011 = vmatpush1.msra.mxu0 0.0
  %2012 = vmatprep.subr.mxu0 0.0
  %2013 = vmatpush1.msra.mxu0 0.0
  %2014 = vmatprep.subr.mxu0 0.0
  %2015 = vmatpush1.msra.mxu0 0.0
  %2016 = vmatprep.subr.mxu0 0.0
  %2017 = vmatpush1.msra.mxu0 0.0
  %2018 = vmatprep.subr.mxu0 0.0
  %2019 = vmatpush1.msra.mxu0 0.0
  %2020 = vmatprep.subr.mxu0 0.0
  %2021 = vmatpush1.msra.mxu0 0.0
  %2022 = vmatprep.subr.mxu0 0.0
  %2023 = vmatpush1.msra.mxu0 0.0
  %2024 = vmatprep.subr.mxu0 0.0
  %2025 = vmatpush1.msra.mxu0 0.0
  %2026 = vmatprep.subr.mxu0 0.0
  %2027 = vmatpush1.msra.mxu0 0.0
  %2028 = vmatprep.subr.mxu0 0.0
  %2029 = vmatpush1.msra.mxu0 0.0
  %2030 = vmatprep.subr.mxu0 0.0
  %2031 = vmatpush1.msra.mxu0 0.0
  %2032 = vmatprep.subr.mxu0 0.0
  %2033 = vmatpush1.msra.mxu0 0.0
  %2034 = vmatprep.subr.mxu0 0.0
  %2035 = vmatpush1.msra.mxu0 0.0
  %2036 = vmatprep.mubr.f32.mxu0 0.0
  %2037 = vmatmul.mubr.f32.gmra.mrb[0].mxu0 %v1967
  %v2038 = vpop.f32.mrb[0].mxu0
  %v2039 = vadd.f32 0.0, %v2038
  %v2040 = vpop.f32.mrb[0].mxu0
  %2041 = vmatprep.mubr.f32.mxu0 0.0
  %2042 = vmatmul.mubr.f32.gmra.mrb[0].mxu0 %v1970
  %v2043 = vpop.f32.mrb[0].mxu0
  %v2044 = vadd.f32 0.0, %v2043
  %v2045 = vpop.f32.mrb[0].mxu0
  %2046 = vdwg.mxu0
  %v2047 = vadd.f32 %v1828, %v2039
  %v2048 = vadd.f32 %v1829, %v2044
  %s2049 = scalar_lea.vmem %s5, 4
  %v2050 = vld [vmem:[%s2049] sm:$0x1]
  %v2051 = vmul.f32 %v2047, %v2047
  %v2052 = vmul.f32 %v2048, %v2048
  %v2053 = vsel %vm167, %v2051, 0.0
  %2054 = vadd.xlane.f32.xlu0 %v2053
  %v2055 = vpop.xlane.xlu0 %2054
  %v2056 = vsel %vm167, %v2052, 0.0
  %2057 = vadd.xlane.f32.xlu0 %v2056
  %v2058 = vpop.xlane.xlu0 %2057
  %v2059 = vmul.f32 %v2055, %v174
  %v2060 = vmul.f32 %v2058, %v174
  %v2061 = vadd.f32 %v2059, 1e-06
  %v2062 = vadd.f32 %v2060, 1e-06
  %v2063 = vrsqrt.pop %v2061
  %v2064 = vrsqrt.pop %v2062
  %v2065 = vmul.f32 %v2047, %v2063
  %v2066 = vmul.f32 %v2048, %v2064
  %v2067 = vadd.f32 %v2050, 1.0
  %v2069 = vlaneseq
  %v2070 = vshrl.u32 %v2069, 7
  %v2071 = vsub.s32 0, %v2070
  %v2072 = vrot.slane %v2067, %v2071
  %v2074 = vmul.f32 %v2065, %v2072
  %v2075 = vmul.f32 %v2066, %v2072
  %v2076 = vld [vmem:[%s2] sm:$0xff]
  %v2077 = vld [vmem:[%s2 + $0x8] sm:$0xff]
  %v2078 = vld [vmem:[%s2 + $0x10] sm:$0xff]
  %v2079 = vld [vmem:[%s2 + $0x18] sm:$0xff]
  %v2081 = vsel %vm167, %v2074, 0
  %v2084 = vsel %vm167, %v2075, 0
  %2086 = vmatprep.subr.mxu0 0.0
  %2087 = vmatpush1.msra.mxu0 %v2076
  %2088 = vmatprep.subr.mxu0 0.0
  %2089 = vmatpush1.msra.mxu0 %v2077
  %2090 = vmatprep.subr.mxu0 0.0
  %2091 = vmatpush1.msra.mxu0 %v2078
  %2092 = vmatprep.subr.mxu0 0.0
  %2093 = vmatpush1.msra.mxu0 %v2079
  %2094 = vmatprep.subr.mxu0 0.0
  %2095 = vmatpush1.msra.mxu0 0.0
  %2096 = vmatprep.subr.mxu0 0.0
  %2097 = vmatpush1.msra.mxu0 0.0
  %2098 = vmatprep.subr.mxu0 0.0
  %2099 = vmatpush1.msra.mxu0 0.0
  %2100 = vmatprep.subr.mxu0 0.0
  %2101 = vmatpush1.msra.mxu0 0.0
  %2102 = vmatprep.subr.mxu0 0.0
  %2103 = vmatpush1.msra.mxu0 0.0
  %2104 = vmatprep.subr.mxu0 0.0
  %2105 = vmatpush1.msra.mxu0 0.0
  %2106 = vmatprep.subr.mxu0 0.0
  %2107 = vmatpush1.msra.mxu0 0.0
  %2108 = vmatprep.subr.mxu0 0.0
  %2109 = vmatpush1.msra.mxu0 0.0
  %2110 = vmatprep.subr.mxu0 0.0
  %2111 = vmatpush1.msra.mxu0 0.0
  %2112 = vmatprep.subr.mxu0 0.0
  %2113 = vmatpush1.msra.mxu0 0.0
  %2114 = vmatprep.subr.mxu0 0.0
  %2115 = vmatpush1.msra.mxu0 0.0
  %2116 = vmatprep.subr.mxu0 0.0
  %2117 = vmatpush1.msra.mxu0 0.0
  %2118 = vmatprep.subr.mxu0 0.0
  %2119 = vmatpush1.msra.mxu0 0.0
  %2120 = vmatprep.subr.mxu0 0.0
  %2121 = vmatpush1.msra.mxu0 0.0
  %2122 = vmatprep.subr.mxu0 0.0
  %2123 = vmatpush1.msra.mxu0 0.0
  %2124 = vmatprep.subr.mxu0 0.0
  %2125 = vmatpush1.msra.mxu0 0.0
  %2126 = vmatprep.subr.mxu0 0.0
  %2127 = vmatpush1.msra.mxu0 0.0
  %2128 = vmatprep.subr.mxu0 0.0
  %2129 = vmatpush1.msra.mxu0 0.0
  %2130 = vmatprep.subr.mxu0 0.0
  %2131 = vmatpush1.msra.mxu0 0.0
  %2132 = vmatprep.subr.mxu0 0.0
  %2133 = vmatpush1.msra.mxu0 0.0
  %2134 = vmatprep.subr.mxu0 0.0
  %2135 = vmatpush1.msra.mxu0 0.0
  %2136 = vmatprep.subr.mxu0 0.0
  %2137 = vmatpush1.msra.mxu0 0.0
  %2138 = vmatprep.subr.mxu0 0.0
  %2139 = vmatpush1.msra.mxu0 0.0
  %2140 = vmatprep.subr.mxu0 0.0
  %2141 = vmatpush1.msra.mxu0 0.0
  %2142 = vmatprep.subr.mxu0 0.0
  %2143 = vmatpush1.msra.mxu0 0.0
  %2144 = vmatprep.subr.mxu0 0.0
  %2145 = vmatpush1.msra.mxu0 0.0
  %2146 = vmatprep.subr.mxu0 0.0
  %2147 = vmatpush1.msra.mxu0 0.0
  %2148 = vmatprep.subr.mxu0 0.0
  %2149 = vmatpush1.msra.mxu0 0.0
  %2150 = vmatprep.mubr.f32.mxu0 0.0
  %2151 = vmatmul.mubr.f32.gmra.mrb[0].mxu0 %v2081
  %v2152 = vpop.f32.mrb[0].mxu0
  %v2153 = vadd.f32 0.0, %v2152
  %v2154 = vpop.f32.mrb[0].mxu0
  %2155 = vmatprep.mubr.f32.mxu0 0.0
  %2156 = vmatmul.mubr.f32.gmra.mrb[0].mxu0 %v2084
  %v2157 = vpop.f32.mrb[0].mxu0
  %v2158 = vadd.f32 0.0, %v2157
  %v2159 = vpop.f32.mrb[0].mxu0
  %2160 = vdwg.mxu0
  %2161 = vst [vmem:[%s8] sm:$0xff] %v2153
  %2162 = vst [vmem:[%s8 + $0x8] sm:$0xff] %v2158
  // Predicated region
  $region34: #{_gemma_forward_jit.1} parent=0 // pred_check
    _
  $region35: #{_gemma_forward_jit.1} parent=0 // pred_check_branch
    %2164 = sbr.rel (0) target = $region37
  $region36: #{_gemma_forward_jit.1} parent=0 // pred_region
    _
  $region37: #{_gemma_forward_jit.1} parent=0 // pred_fallthru
    _
  // Predicated region
  $region38: #{_gemma_forward_jit.1} parent=0 // pred_check
    _
  $region39: #{_gemma_forward_jit.1} parent=0 // pred_check_branch
    %2166 = sbr.rel (0) target = $region41
  $region40: #{_gemma_forward_jit.1} parent=0 // pred_region
    _
  $region41: #{_gemma_forward_jit.1} parent=0 // pred_fallthru
    _

</llo_original>
